<compile_context>
chip_gen: v7x
topology: tpu7x:2x2x1
jax: 0.10.0
libtpu: 0.0.40
codegen_flags: <defaults>
</compile_context>

<pallas_src>
import functools
import math

import jax
import jax.numpy as jnp
from jax.experimental import pallas as pl
from jax.experimental.pallas import tpu as pltpu


# ----------------------------------------------------------------------------
# Fused kernel: learnable-embedding concat -> MHA1 -> learned-pooling MHA
# ----------------------------------------------------------------------------
def _fused_attention_kernel(
    # per-batch inputs / shared parameters
    embq_ref, embk_ref, embv_ref,            # (1, L, Eq/Ek/Ev) learnable embeddings
    q_ref, k_ref, v_ref,                     # (1, Sq/Sk, Eq/Ek/Ev) raw sequences
    qa_ref, ka_ref,                          # (1, 1, L+Sq) / (1, 1, L+Sk) masks (1=keep)
    wq_ref, bq_ref, wk_ref, bk_ref,          # MHA1 projections (pre-transposed, bf16;
    wv_ref, bv_ref, wo_ref, bo_ref,          #   1/sqrt(Dh) folded into wq/bq)
    pq_ref,                                  # (1, Eq) pre-projected + scaled pool query (f32)
    pwkv_ref, pbkv_ref, pwo_ref, pbo_ref,    # pool MHA fused k/v proj + out proj
    # output
    o_ref,                                   # (1, 1, Eq)
    *, num_heads, head_dim, pool_num_heads, pool_head_dim, embed_dim,
):
    f32 = jnp.float32
    bf16 = jnp.bfloat16

    def mh_attention(q, k, v, bias, n_heads, d_head):
        # q: (Sq, E) f32, k/v: (Sk, E) f32, bias: (1, Sk) additive 0 / -1e30.
        qb = q.astype(bf16)
        kb = k.astype(bf16)
        vb = v.astype(bf16)
        # hoist the broadcast out of the head loop (JAX does not CSE it)
        bias_b = jnp.broadcast_to(bias, (q.shape[0], bias.shape[-1]))
        outs = []
        for h in range(n_heads):                         # short static loop (4 heads)
            sl = slice(h * d_head, (h + 1) * d_head)
            # scores = q_h @ k_h^T  (contraction on the feature dim, no transpose)
            s = jax.lax.dot_general(
                qb[:, sl], kb[:, sl], (((1,), (1,)), ((), ())),
                preferred_element_type=f32) + bias_b      # (Sq, Sk)
            s = s - jnp.max(s, axis=-1, keepdims=True)
            p = jnp.exp(s)
            denom = jnp.sum(p, axis=-1, keepdims=True)
            oh = jnp.dot(p.astype(bf16), vb[:, sl], preferred_element_type=f32)
            # normalize AFTER PV: Sq*Dh muls + EUP reciprocal instead of Sq*Sk divs
            outs.append(oh * pl.reciprocal(denom, approx=True))
        return jnp.concatenate(outs, axis=-1)             # (Sq, E) f32, stays in vregs

    # ---- concat learnable embeddings with the input sequences (in VMEM) ----
    x_q = jnp.concatenate([embq_ref[0], q_ref[0]], axis=0)     # (L+Sq, Eq)
    x_k = jnp.concatenate([embk_ref[0], k_ref[0]], axis=0)     # (L+Sk, Ek)
    x_v = jnp.concatenate([embv_ref[0], v_ref[0]], axis=0)     # (L+Sk, Ev)

    # ---- additive key-padding masks, computed once per batch element ----
    k_bias = (ka_ref[0] - 1.0) * 1e30                          # (1, L+Sk)
    q_bias = (qa_ref[0] - 1.0) * 1e30                          # (1, L+Sq)

    # ---- MHA 1: projections (bf16 MXU, f32 accumulate); scale folded into wq/bq ----
    qp = jnp.dot(x_q.astype(bf16), wq_ref[...], preferred_element_type=f32) + bq_ref[...]
    kp = jnp.dot(x_k.astype(bf16), wk_ref[...], preferred_element_type=f32) + bk_ref[...]
    vp = jnp.dot(x_v.astype(bf16), wv_ref[...], preferred_element_type=f32) + bv_ref[...]

    ctx1 = mh_attention(qp, kp, vp, k_bias, num_heads, head_dim)          # (L+Sq, Eq)
    att_out = (jnp.dot(ctx1.astype(bf16), wo_ref[...],
                       preferred_element_type=f32) + bo_ref[...])         # (L+Sq, Eq)

    # ---- learned-pooling MHA: fused k/v projection, pre-projected query ----
    kv = (jnp.dot(att_out.astype(bf16), pwkv_ref[...],
                  preferred_element_type=f32) + pbkv_ref[...])            # (L+Sq, 2*Eq)
    pk = kv[:, :embed_dim]
    pv = kv[:, embed_dim:]
    ctx2 = mh_attention(pq_ref[...], pk, pv, q_bias,
                        pool_num_heads, pool_head_dim)                    # (1, Eq)
    o_ref[0] = (jnp.dot(ctx2.astype(bf16), pwo_ref[...],
                        preferred_element_type=f32) + pbo_ref[...])       # (1, Eq)


# ----------------------------------------------------------------------------
# Forward wrapper (parameter reshaping / weight pre-transposition is glue)
# ----------------------------------------------------------------------------
def attention_with_learnable_embedding(params, query, key_seq, value,
                                       query_attention, key_attention,
                                       num_heads=4):
    f32 = jnp.float32
    bf16 = jnp.bfloat16

    B, Sq, Eq = query.shape
    Sk, Ek = key_seq.shape[1], key_seq.shape[2]
    Ev = value.shape[2]
    L = params["emb_q"].shape[1]
    St_q, St_k = L + Sq, L + Sk
    Dh = Eq // num_heads
    scale = 1.0 / math.sqrt(Dh)
    pool_heads = 4                     # LearnedPoolingLayer hardcodes n_heads=4
    pool_Dh = Eq // pool_heads
    pool_scale = 1.0 / math.sqrt(pool_Dh)

    a = params["attn"]
    p = params["pool_attn"]

    # Pre-transposed (In, Out) bf16 weights, f32 (1, Out) biases.
    # 1/sqrt(Dh) is folded into the query projection weight + bias.
    wq_t = (a["wq"].T * scale).astype(bf16)
    bq = (a["bq"] * scale).reshape(1, Eq).astype(f32)
    wk_t = a["wk"].T.astype(bf16); bk = a["bk"].reshape(1, Eq).astype(f32)
    wv_t = a["wv"].T.astype(bf16); bv = a["bv"].reshape(1, Eq).astype(f32)
    wo_t = a["wo"].T.astype(bf16); bo = a["bo"].reshape(1, Eq).astype(f32)

    # Pool attention: the learned query projection is input independent, so fold
    # projection + bias + 1/sqrt(Dh) into one (1, Eq) constant.
    pq_proj = ((params["pool_query"][0] @ p["wq"].T + p["bq"]) * pool_scale).astype(f32)
    pwkv_t = jnp.concatenate([p["wk"].T, p["wv"].T], axis=1).astype(bf16)   # (Eq, 2Eq)
    pbkv = jnp.concatenate([p["bk"], p["bv"]]).reshape(1, 2 * Eq).astype(f32)
    pwo_t = p["wo"].T.astype(bf16); pbo = p["bo"].reshape(1, Eq).astype(f32)

    # Padded masks: learnable prefix is always attended (matches torch concat of ones).
    ones_l = jnp.ones((B, L), f32)
    qa_full = jnp.concatenate([ones_l, query_attention.astype(f32)],
                              axis=-1).reshape(B, 1, St_q)
    ka_full = jnp.concatenate([ones_l, key_attention.astype(f32)],
                              axis=-1).reshape(B, 1, St_k)

    kernel = functools.partial(_fused_attention_kernel,
                               num_heads=num_heads, head_dim=Dh,
                               pool_num_heads=pool_heads, pool_head_dim=pool_Dh,
                               embed_dim=Eq)

    def const(shape):          # whole-array block, fetched once (constant index_map)
        return pl.BlockSpec(shape, lambda b: (0,) * len(shape))

    def per_batch(s1, s2):     # one batch element per grid step
        return pl.BlockSpec((1, s1, s2), lambda b: (b, 0, 0))

    out = pl.pallas_call(
        kernel,
        out_shape=jax.ShapeDtypeStruct((B, 1, Eq), f32),
        grid=(B,),
        in_specs=[
            const((1, L, Eq)), const((1, L, Ek)), const((1, L, Ev)),
            per_batch(Sq, Eq), per_batch(Sk, Ek), per_batch(Sk, Ev),
            per_batch(1, St_q), per_batch(1, St_k),
            const((Eq, Eq)), const((1, Eq)),
            const((Ek, Eq)), const((1, Eq)),
            const((Ev, Eq)), const((1, Eq)),
            const((Eq, Eq)), const((1, Eq)),
            const((1, Eq)),
            const((Eq, 2 * Eq)), const((1, 2 * Eq)),
            const((Eq, Eq)), const((1, Eq)),
        ],
        out_specs=pl.BlockSpec((1, 1, Eq), lambda b: (b, 0, 0)),
        compiler_params=pltpu.CompilerParams(
            dimension_semantics=("parallel",),   # v7x: one batch per TensorCore
        ),
    )(
        params["emb_q"].astype(f32), params["emb_k"].astype(f32),
        params["emb_v"].astype(f32),
        query.astype(f32), key_seq.astype(f32), value.astype(f32),
        qa_full, ka_full,
        wq_t, bq, wk_t, bk, wv_t, bv, wo_t, bo,
        pq_proj, pwkv_t, pbkv, pwo_t, pbo,
    )
    return out                                               # (B, 1, Eq)


# ----------------------------------------------------------------------------
# Deterministic synthetic parameters (xavier-normal style)
# ----------------------------------------------------------------------------
def _xavier(key, shape):
    fan_in = shape[-1]
    fan_out = shape[-2] if len(shape) >= 2 else shape[-1]
    std = math.sqrt(2.0 / (fan_in + fan_out))
    return std * jax.random.normal(key, shape, jnp.float32)


def make_params(key, q_dim, k_dim, v_dim, n_learnable, num_heads=4):
    ks = jax.random.split(key, 16)
    attn = {
        "wq": _xavier(ks[0], (q_dim, q_dim)), "bq": jnp.zeros((q_dim,), jnp.float32),
        "wk": _xavier(ks[1], (q_dim, k_dim)), "bk": jnp.zeros((q_dim,), jnp.float32),
        "wv": _xavier(ks[2], (q_dim, v_dim)), "bv": jnp.zeros((q_dim,), jnp.float32),
        "wo": _xavier(ks[3], (q_dim, q_dim)), "bo": jnp.zeros((q_dim,), jnp.float32),
    }
    pool_attn = {
        "wq": _xavier(ks[4], (q_dim, q_dim)), "bq": jnp.zeros((q_dim,), jnp.float32),
        "wk": _xavier(ks[5], (q_dim, q_dim)), "bk": jnp.zeros((q_dim,), jnp.float32),
        "wv": _xavier(ks[6], (q_dim, q_dim)), "bv": jnp.zeros((q_dim,), jnp.float32),
        "wo": _xavier(ks[7], (q_dim, q_dim)), "bo": jnp.zeros((q_dim,), jnp.float32),
    }
    return {
        "emb_q": _xavier(ks[8], (1, n_learnable, q_dim)),
        "emb_k": _xavier(ks[9], (1, n_learnable, k_dim)),
        "emb_v": _xavier(ks[10], (1, n_learnable, v_dim)),
        "pool_query": _xavier(ks[11], (1, 1, q_dim)),
        "attn": attn,
        "pool_attn": pool_attn,
    }


if __name__ == "__main__":
    # Small shapes consistent with the module's forward.  torch MHA here has
    # kdim == embed_dim (kdim not passed), so key_emb_size == query_emb_size.
    B, Sq, Sk = 2, 8, 8
    Eq = Ek = 32
    Ev = 16
    L = 8          # n_learnable_embeddings
    H = 4

    root = jax.random.PRNGKey(0)
    kp, kq, kk, kv, kqa, kka = jax.random.split(root, 6)

    params = make_params(kp, Eq, Ek, Ev, L, H)

    query = jax.random.normal(kq, (B, Sq, Eq), jnp.float32)
    key_seq = jax.random.normal(kk, (B, Sk, Ek), jnp.float32)
    value = jax.random.normal(kv, (B, Sk, Ev), jnp.float32)
    query_attention = (jax.random.uniform(kqa, (B, Sq)) > 0.3).astype(jnp.float32)
    key_attention = (jax.random.uniform(kka, (B, Sk)) > 0.3).astype(jnp.float32)

    fwd = jax.jit(attention_with_learnable_embedding, static_argnums=(6,))
    out = fwd(params, query, key_seq, value, query_attention, key_attention, H)
    out = jax.block_until_ready(out)
    assert out.shape == (B, 1, Eq)
    assert bool(jnp.all(jnp.isfinite(out)))
    print("KERNEL_OK")
</pallas_src>

<mosaic_0001>
module attributes {stable_mosaic.version = 11 : i64} {
  func.func @_fused_attention_kernel(%arg0: i32, %arg1: memref<1x8x32xf32, #tpu.memory_space<vmem>>, %arg2: memref<1x8x32xf32, #tpu.memory_space<vmem>>, %arg3: memref<1x8x16xf32, #tpu.memory_space<vmem>>, %arg4: memref<1x8x32xf32, #tpu.memory_space<vmem>>, %arg5: memref<1x8x32xf32, #tpu.memory_space<vmem>>, %arg6: memref<1x8x16xf32, #tpu.memory_space<vmem>>, %arg7: memref<1x1x16xf32, #tpu.memory_space<vmem>>, %arg8: memref<1x1x16xf32, #tpu.memory_space<vmem>>, %arg9: memref<32x32xbf16, #tpu.memory_space<vmem>>, %arg10: memref<1x32xf32, #tpu.memory_space<vmem>>, %arg11: memref<32x32xbf16, #tpu.memory_space<vmem>>, %arg12: memref<1x32xf32, #tpu.memory_space<vmem>>, %arg13: memref<16x32xbf16, #tpu.memory_space<vmem>>, %arg14: memref<1x32xf32, #tpu.memory_space<vmem>>, %arg15: memref<32x32xbf16, #tpu.memory_space<vmem>>, %arg16: memref<1x32xf32, #tpu.memory_space<vmem>>, %arg17: memref<1x32xf32, #tpu.memory_space<vmem>>, %arg18: memref<32x64xbf16, #tpu.memory_space<vmem>>, %arg19: memref<1x64xf32, #tpu.memory_space<vmem>>, %arg20: memref<32x32xbf16, #tpu.memory_space<vmem>>, %arg21: memref<1x32xf32, #tpu.memory_space<vmem>>, %arg22: memref<1x1x32xf32, #tpu.memory_space<vmem>>) attributes {dimension_semantics = [#tpu.dimension_semantics<parallel>], iteration_bounds = array<i64: 2>, scalar_prefetch = 0 : i64, scratch_operands = 0 : i64, tpu.core_type = #tpu.core_type<tc>, window_params = [{pipeline_mode = #tpu.pipeline_mode<synchronous>, transform_indices = @transform_0, window_bounds = array<i64: 1, 8, 32>}, {pipeline_mode = #tpu.pipeline_mode<synchronous>, transform_indices = @transform_1, window_bounds = array<i64: 1, 8, 32>}, {pipeline_mode = #tpu.pipeline_mode<synchronous>, transform_indices = @transform_2, window_bounds = array<i64: 1, 8, 16>}, {transform_indices = @transform_3, window_bounds = array<i64: 1, 8, 32>}, {transform_indices = @transform_4, window_bounds = array<i64: 1, 8, 32>}, {transform_indices = @transform_5, window_bounds = array<i64: 1, 8, 16>}, {transform_indices = @transform_6, window_bounds = array<i64: 1, 1, 16>}, {transform_indices = @transform_7, window_bounds = array<i64: 1, 1, 16>}, {pipeline_mode = #tpu.pipeline_mode<synchronous>, transform_indices = @transform_8, window_bounds = array<i64: 32, 32>}, {pipeline_mode = #tpu.pipeline_mode<synchronous>, transform_indices = @transform_9, window_bounds = array<i64: 1, 32>}, {pipeline_mode = #tpu.pipeline_mode<synchronous>, transform_indices = @transform_10, window_bounds = array<i64: 32, 32>}, {pipeline_mode = #tpu.pipeline_mode<synchronous>, transform_indices = @transform_11, window_bounds = array<i64: 1, 32>}, {pipeline_mode = #tpu.pipeline_mode<synchronous>, transform_indices = @transform_12, window_bounds = array<i64: 16, 32>}, {pipeline_mode = #tpu.pipeline_mode<synchronous>, transform_indices = @transform_13, window_bounds = array<i64: 1, 32>}, {pipeline_mode = #tpu.pipeline_mode<synchronous>, transform_indices = @transform_14, window_bounds = array<i64: 32, 32>}, {pipeline_mode = #tpu.pipeline_mode<synchronous>, transform_indices = @transform_15, window_bounds = array<i64: 1, 32>}, {pipeline_mode = #tpu.pipeline_mode<synchronous>, transform_indices = @transform_16, window_bounds = array<i64: 1, 32>}, {pipeline_mode = #tpu.pipeline_mode<synchronous>, transform_indices = @transform_17, window_bounds = array<i64: 32, 64>}, {pipeline_mode = #tpu.pipeline_mode<synchronous>, transform_indices = @transform_18, window_bounds = array<i64: 1, 64>}, {pipeline_mode = #tpu.pipeline_mode<synchronous>, transform_indices = @transform_19, window_bounds = array<i64: 32, 32>}, {pipeline_mode = #tpu.pipeline_mode<synchronous>, transform_indices = @transform_20, window_bounds = array<i64: 1, 32>}, {transform_indices = @transform_21, window_bounds = array<i64: 1, 1, 32>}]} {
    %c0 = arith.constant 0 : index
    %c0_0 = arith.constant 0 : index
    %c0_1 = arith.constant 0 : index
    %0 = vector.load %arg1[%c0, %c0_0, %c0_1] : memref<1x8x32xf32, #tpu.memory_space<vmem>>, vector<1x8x32xf32>
    %1 = vector.shape_cast %0 : vector<1x8x32xf32> to vector<8x32xf32>
    %c0_2 = arith.constant 0 : index
    %c0_3 = arith.constant 0 : index
    %c0_4 = arith.constant 0 : index
    %2 = vector.load %arg4[%c0_2, %c0_3, %c0_4] : memref<1x8x32xf32, #tpu.memory_space<vmem>>, vector<1x8x32xf32>
    %3 = vector.shape_cast %2 : vector<1x8x32xf32> to vector<8x32xf32>
    %4 = tpu.concatenate %1, %3 in 0 : vector<8x32xf32>, vector<8x32xf32> -> vector<16x32xf32>
    %c0_5 = arith.constant 0 : index
    %c0_6 = arith.constant 0 : index
    %c0_7 = arith.constant 0 : index
    %5 = vector.load %arg2[%c0_5, %c0_6, %c0_7] : memref<1x8x32xf32, #tpu.memory_space<vmem>>, vector<1x8x32xf32>
    %6 = vector.shape_cast %5 : vector<1x8x32xf32> to vector<8x32xf32>
    %c0_8 = arith.constant 0 : index
    %c0_9 = arith.constant 0 : index
    %c0_10 = arith.constant 0 : index
    %7 = vector.load %arg5[%c0_8, %c0_9, %c0_10] : memref<1x8x32xf32, #tpu.memory_space<vmem>>, vector<1x8x32xf32>
    %8 = vector.shape_cast %7 : vector<1x8x32xf32> to vector<8x32xf32>
    %9 = tpu.concatenate %6, %8 in 0 : vector<8x32xf32>, vector<8x32xf32> -> vector<16x32xf32>
    %c0_11 = arith.constant 0 : index
    %c0_12 = arith.constant 0 : index
    %c0_13 = arith.constant 0 : index
    %10 = vector.load %arg3[%c0_11, %c0_12, %c0_13] : memref<1x8x16xf32, #tpu.memory_space<vmem>>, vector<1x8x16xf32>
    %11 = vector.shape_cast %10 : vector<1x8x16xf32> to vector<8x16xf32>
    %c0_14 = arith.constant 0 : index
    %c0_15 = arith.constant 0 : index
    %c0_16 = arith.constant 0 : index
    %12 = vector.load %arg6[%c0_14, %c0_15, %c0_16] : memref<1x8x16xf32, #tpu.memory_space<vmem>>, vector<1x8x16xf32>
    %13 = vector.shape_cast %12 : vector<1x8x16xf32> to vector<8x16xf32>
    %14 = tpu.concatenate %11, %13 in 0 : vector<8x16xf32>, vector<8x16xf32> -> vector<16x16xf32>
    %c0_17 = arith.constant 0 : index
    %c0_18 = arith.constant 0 : index
    %c0_19 = arith.constant 0 : index
    %15 = vector.load %arg8[%c0_17, %c0_18, %c0_19] : memref<1x1x16xf32, #tpu.memory_space<vmem>>, vector<1x1x16xf32>
    %16 = vector.shape_cast %15 : vector<1x1x16xf32> to vector<1x16xf32>
    %cst = arith.constant 1.000000e+00 : f32
    %17 = vector.broadcast %cst : f32 to vector<1x16xf32>
    %18 = arith.subf %16, %17 : vector<1x16xf32>
    %cst_20 = arith.constant 1.000000e+30 : f32
    %19 = vector.broadcast %cst_20 : f32 to vector<1x16xf32>
    %20 = arith.mulf %18, %19 : vector<1x16xf32>
    %c0_21 = arith.constant 0 : index
    %c0_22 = arith.constant 0 : index
    %c0_23 = arith.constant 0 : index
    %21 = vector.load %arg7[%c0_21, %c0_22, %c0_23] : memref<1x1x16xf32, #tpu.memory_space<vmem>>, vector<1x1x16xf32>
    %22 = vector.shape_cast %21 : vector<1x1x16xf32> to vector<1x16xf32>
    %cst_24 = arith.constant 1.000000e+00 : f32
    %23 = vector.broadcast %cst_24 : f32 to vector<1x16xf32>
    %24 = arith.subf %22, %23 : vector<1x16xf32>
    %cst_25 = arith.constant 1.000000e+30 : f32
    %25 = vector.broadcast %cst_25 : f32 to vector<1x16xf32>
    %26 = arith.mulf %24, %25 : vector<1x16xf32>
    %27 = arith.truncf %4 : vector<16x32xf32> to vector<16x32xbf16>
    %c0_26 = arith.constant 0 : index
    %c0_27 = arith.constant 0 : index
    %28 = vector.load %arg9[%c0_26, %c0_27] : memref<32x32xbf16, #tpu.memory_space<vmem>>, vector<32x32xbf16>
    %cst_28 = arith.constant dense<0.000000e+00> : vector<16x32xf32>
    %29 = tpu.matmul %27, %28, %cst_28 {dimension_numbers = #tpu.dot_dimension_numbers<[1], [0], [0], [1], [0, 0, 1, 1], [], []>} : vector<16x32xbf16>, vector<32x32xbf16>, vector<16x32xf32> -> vector<16x32xf32>
    %c0_29 = arith.constant 0 : index
    %c0_30 = arith.constant 0 : index
    %30 = vector.load %arg10[%c0_29, %c0_30] : memref<1x32xf32, #tpu.memory_space<vmem>>, vector<1x32xf32>
    %31 = vector.broadcast %30 : vector<1x32xf32> to vector<16x32xf32>
    %32 = arith.addf %29, %31 : vector<16x32xf32>
    %33 = arith.truncf %9 : vector<16x32xf32> to vector<16x32xbf16>
    %c0_31 = arith.constant 0 : index
    %c0_32 = arith.constant 0 : index
    %34 = vector.load %arg11[%c0_31, %c0_32] : memref<32x32xbf16, #tpu.memory_space<vmem>>, vector<32x32xbf16>
    %cst_33 = arith.constant dense<0.000000e+00> : vector<16x32xf32>
    %35 = tpu.matmul %33, %34, %cst_33 {dimension_numbers = #tpu.dot_dimension_numbers<[1], [0], [0], [1], [0, 0, 1, 1], [], []>} : vector<16x32xbf16>, vector<32x32xbf16>, vector<16x32xf32> -> vector<16x32xf32>
    %c0_34 = arith.constant 0 : index
    %c0_35 = arith.constant 0 : index
    %36 = vector.load %arg12[%c0_34, %c0_35] : memref<1x32xf32, #tpu.memory_space<vmem>>, vector<1x32xf32>
    %37 = vector.broadcast %36 : vector<1x32xf32> to vector<16x32xf32>
    %38 = arith.addf %35, %37 : vector<16x32xf32>
    %39 = arith.truncf %14 : vector<16x16xf32> to vector<16x16xbf16>
    %c0_36 = arith.constant 0 : index
    %c0_37 = arith.constant 0 : index
    %40 = vector.load %arg13[%c0_36, %c0_37] : memref<16x32xbf16, #tpu.memory_space<vmem>>, vector<16x32xbf16>
    %cst_38 = arith.constant dense<0.000000e+00> : vector<16x32xf32>
    %41 = tpu.matmul %39, %40, %cst_38 {dimension_numbers = #tpu.dot_dimension_numbers<[1], [0], [0], [1], [0, 0, 1, 1], [], []>} : vector<16x16xbf16>, vector<16x32xbf16>, vector<16x32xf32> -> vector<16x32xf32>
    %c0_39 = arith.constant 0 : index
    %c0_40 = arith.constant 0 : index
    %42 = vector.load %arg14[%c0_39, %c0_40] : memref<1x32xf32, #tpu.memory_space<vmem>>, vector<1x32xf32>
    %43 = vector.broadcast %42 : vector<1x32xf32> to vector<16x32xf32>
    %44 = arith.addf %41, %43 : vector<16x32xf32>
    %45 = arith.truncf %32 : vector<16x32xf32> to vector<16x32xbf16>
    %46 = arith.truncf %38 : vector<16x32xf32> to vector<16x32xbf16>
    %47 = arith.truncf %44 : vector<16x32xf32> to vector<16x32xbf16>
    %48 = vector.shape_cast %20 : vector<1x16xf32> to vector<1x16xf32>
    %49 = vector.broadcast %48 : vector<1x16xf32> to vector<16x16xf32>
    %50 = vector.extract_strided_slice %45 {offsets = [0, 0], sizes = [16, 8], strides = [1, 1]} : vector<16x32xbf16> to vector<16x8xbf16>
    %51 = vector.extract_strided_slice %46 {offsets = [0, 0], sizes = [16, 8], strides = [1, 1]} : vector<16x32xbf16> to vector<16x8xbf16>
    %cst_41 = arith.constant dense<0.000000e+00> : vector<16x16xf32>
    %52 = tpu.matmul %50, %51, %cst_41 {dimension_numbers = #tpu.dot_dimension_numbers<[1], [1], [0], [0], [0, 0, 1, 0], [], []>} : vector<16x8xbf16>, vector<16x8xbf16>, vector<16x16xf32> -> vector<16x16xf32>
    %53 = arith.addf %52, %49 : vector<16x16xf32>
    %cst_42 = arith.constant dense<0xFF800000> : vector<16xf32>
    %54 = vector.multi_reduction <maximumf>, %53, %cst_42 [1] : vector<16x16xf32> to vector<16xf32>
    %55 = vector.shape_cast %54 : vector<16xf32> to vector<16x1xf32>
    %56 = vector.broadcast %55 : vector<16x1xf32> to vector<16x16xf32>
    %57 = arith.subf %53, %56 : vector<16x16xf32>
    %58 = math.exp %57 : vector<16x16xf32>
    %cst_43 = arith.constant dense<0.000000e+00> : vector<16xf32>
    %59 = vector.multi_reduction <add>, %58, %cst_43 [1] : vector<16x16xf32> to vector<16xf32>
    %60 = vector.shape_cast %59 : vector<16xf32> to vector<16x1xf32>
    %61 = arith.truncf %58 : vector<16x16xf32> to vector<16x16xbf16>
    %62 = vector.extract_strided_slice %47 {offsets = [0, 0], sizes = [16, 8], strides = [1, 1]} : vector<16x32xbf16> to vector<16x8xbf16>
    %cst_44 = arith.constant dense<0.000000e+00> : vector<16x8xf32>
    %63 = tpu.matmul %61, %62, %cst_44 {dimension_numbers = #tpu.dot_dimension_numbers<[1], [0], [0], [1], [0, 0, 1, 1], [], []>} : vector<16x16xbf16>, vector<16x8xbf16>, vector<16x8xf32> -> vector<16x8xf32>
    %64 = tpu.reciprocal %60 {approx = true} : vector<16x1xf32> -> vector<16x1xf32>
    %65 = vector.broadcast %64 : vector<16x1xf32> to vector<16x8xf32>
    %66 = arith.mulf %63, %65 : vector<16x8xf32>
    %67 = vector.extract_strided_slice %45 {offsets = [0, 8], sizes = [16, 8], strides = [1, 1]} : vector<16x32xbf16> to vector<16x8xbf16>
    %68 = vector.extract_strided_slice %46 {offsets = [0, 8], sizes = [16, 8], strides = [1, 1]} : vector<16x32xbf16> to vector<16x8xbf16>
    %cst_45 = arith.constant dense<0.000000e+00> : vector<16x16xf32>
    %69 = tpu.matmul %67, %68, %cst_45 {dimension_numbers = #tpu.dot_dimension_numbers<[1], [1], [0], [0], [0, 0, 1, 0], [], []>} : vector<16x8xbf16>, vector<16x8xbf16>, vector<16x16xf32> -> vector<16x16xf32>
    %70 = arith.addf %69, %49 : vector<16x16xf32>
    %cst_46 = arith.constant dense<0xFF800000> : vector<16xf32>
    %71 = vector.multi_reduction <maximumf>, %70, %cst_46 [1] : vector<16x16xf32> to vector<16xf32>
    %72 = vector.shape_cast %71 : vector<16xf32> to vector<16x1xf32>
    %73 = vector.broadcast %72 : vector<16x1xf32> to vector<16x16xf32>
    %74 = arith.subf %70, %73 : vector<16x16xf32>
    %75 = math.exp %74 : vector<16x16xf32>
    %cst_47 = arith.constant dense<0.000000e+00> : vector<16xf32>
    %76 = vector.multi_reduction <add>, %75, %cst_47 [1] : vector<16x16xf32> to vector<16xf32>
    %77 = vector.shape_cast %76 : vector<16xf32> to vector<16x1xf32>
    %78 = arith.truncf %75 : vector<16x16xf32> to vector<16x16xbf16>
    %79 = vector.extract_strided_slice %47 {offsets = [0, 8], sizes = [16, 8], strides = [1, 1]} : vector<16x32xbf16> to vector<16x8xbf16>
    %cst_48 = arith.constant dense<0.000000e+00> : vector<16x8xf32>
    %80 = tpu.matmul %78, %79, %cst_48 {dimension_numbers = #tpu.dot_dimension_numbers<[1], [0], [0], [1], [0, 0, 1, 1], [], []>} : vector<16x16xbf16>, vector<16x8xbf16>, vector<16x8xf32> -> vector<16x8xf32>
    %81 = tpu.reciprocal %77 {approx = true} : vector<16x1xf32> -> vector<16x1xf32>
    %82 = vector.broadcast %81 : vector<16x1xf32> to vector<16x8xf32>
    %83 = arith.mulf %80, %82 : vector<16x8xf32>
    %84 = vector.extract_strided_slice %45 {offsets = [0, 16], sizes = [16, 8], strides = [1, 1]} : vector<16x32xbf16> to vector<16x8xbf16>
    %85 = vector.extract_strided_slice %46 {offsets = [0, 16], sizes = [16, 8], strides = [1, 1]} : vector<16x32xbf16> to vector<16x8xbf16>
    %cst_49 = arith.constant dense<0.000000e+00> : vector<16x16xf32>
    %86 = tpu.matmul %84, %85, %cst_49 {dimension_numbers = #tpu.dot_dimension_numbers<[1], [1], [0], [0], [0, 0, 1, 0], [], []>} : vector<16x8xbf16>, vector<16x8xbf16>, vector<16x16xf32> -> vector<16x16xf32>
    %87 = arith.addf %86, %49 : vector<16x16xf32>
    %cst_50 = arith.constant dense<0xFF800000> : vector<16xf32>
    %88 = vector.multi_reduction <maximumf>, %87, %cst_50 [1] : vector<16x16xf32> to vector<16xf32>
    %89 = vector.shape_cast %88 : vector<16xf32> to vector<16x1xf32>
    %90 = vector.broadcast %89 : vector<16x1xf32> to vector<16x16xf32>
    %91 = arith.subf %87, %90 : vector<16x16xf32>
    %92 = math.exp %91 : vector<16x16xf32>
    %cst_51 = arith.constant dense<0.000000e+00> : vector<16xf32>
    %93 = vector.multi_reduction <add>, %92, %cst_51 [1] : vector<16x16xf32> to vector<16xf32>
    %94 = vector.shape_cast %93 : vector<16xf32> to vector<16x1xf32>
    %95 = arith.truncf %92 : vector<16x16xf32> to vector<16x16xbf16>
    %96 = vector.extract_strided_slice %47 {offsets = [0, 16], sizes = [16, 8], strides = [1, 1]} : vector<16x32xbf16> to vector<16x8xbf16>
    %cst_52 = arith.constant dense<0.000000e+00> : vector<16x8xf32>
    %97 = tpu.matmul %95, %96, %cst_52 {dimension_numbers = #tpu.dot_dimension_numbers<[1], [0], [0], [1], [0, 0, 1, 1], [], []>} : vector<16x16xbf16>, vector<16x8xbf16>, vector<16x8xf32> -> vector<16x8xf32>
    %98 = tpu.reciprocal %94 {approx = true} : vector<16x1xf32> -> vector<16x1xf32>
    %99 = vector.broadcast %98 : vector<16x1xf32> to vector<16x8xf32>
    %100 = arith.mulf %97, %99 : vector<16x8xf32>
    %101 = vector.extract_strided_slice %45 {offsets = [0, 24], sizes = [16, 8], strides = [1, 1]} : vector<16x32xbf16> to vector<16x8xbf16>
    %102 = vector.extract_strided_slice %46 {offsets = [0, 24], sizes = [16, 8], strides = [1, 1]} : vector<16x32xbf16> to vector<16x8xbf16>
    %cst_53 = arith.constant dense<0.000000e+00> : vector<16x16xf32>
    %103 = tpu.matmul %101, %102, %cst_53 {dimension_numbers = #tpu.dot_dimension_numbers<[1], [1], [0], [0], [0, 0, 1, 0], [], []>} : vector<16x8xbf16>, vector<16x8xbf16>, vector<16x16xf32> -> vector<16x16xf32>
    %104 = arith.addf %103, %49 : vector<16x16xf32>
    %cst_54 = arith.constant dense<0xFF800000> : vector<16xf32>
    %105 = vector.multi_reduction <maximumf>, %104, %cst_54 [1] : vector<16x16xf32> to vector<16xf32>
    %106 = vector.shape_cast %105 : vector<16xf32> to vector<16x1xf32>
    %107 = vector.broadcast %106 : vector<16x1xf32> to vector<16x16xf32>
    %108 = arith.subf %104, %107 : vector<16x16xf32>
    %109 = math.exp %108 : vector<16x16xf32>
    %cst_55 = arith.constant dense<0.000000e+00> : vector<16xf32>
    %110 = vector.multi_reduction <add>, %109, %cst_55 [1] : vector<16x16xf32> to vector<16xf32>
    %111 = vector.shape_cast %110 : vector<16xf32> to vector<16x1xf32>
    %112 = arith.truncf %109 : vector<16x16xf32> to vector<16x16xbf16>
    %113 = vector.extract_strided_slice %47 {offsets = [0, 24], sizes = [16, 8], strides = [1, 1]} : vector<16x32xbf16> to vector<16x8xbf16>
    %cst_56 = arith.constant dense<0.000000e+00> : vector<16x8xf32>
    %114 = tpu.matmul %112, %113, %cst_56 {dimension_numbers = #tpu.dot_dimension_numbers<[1], [0], [0], [1], [0, 0, 1, 1], [], []>} : vector<16x16xbf16>, vector<16x8xbf16>, vector<16x8xf32> -> vector<16x8xf32>
    %115 = tpu.reciprocal %111 {approx = true} : vector<16x1xf32> -> vector<16x1xf32>
    %116 = vector.broadcast %115 : vector<16x1xf32> to vector<16x8xf32>
    %117 = arith.mulf %114, %116 : vector<16x8xf32>
    %118 = tpu.concatenate %66, %83, %100, %117 in 1 : vector<16x8xf32>, vector<16x8xf32>, vector<16x8xf32>, vector<16x8xf32> -> vector<16x32xf32>
    %119 = arith.truncf %118 : vector<16x32xf32> to vector<16x32xbf16>
    %c0_57 = arith.constant 0 : index
    %c0_58 = arith.constant 0 : index
    %120 = vector.load %arg15[%c0_57, %c0_58] : memref<32x32xbf16, #tpu.memory_space<vmem>>, vector<32x32xbf16>
    %cst_59 = arith.constant dense<0.000000e+00> : vector<16x32xf32>
    %121 = tpu.matmul %119, %120, %cst_59 {dimension_numbers = #tpu.dot_dimension_numbers<[1], [0], [0], [1], [0, 0, 1, 1], [], []>} : vector<16x32xbf16>, vector<32x32xbf16>, vector<16x32xf32> -> vector<16x32xf32>
    %c0_60 = arith.constant 0 : index
    %c0_61 = arith.constant 0 : index
    %122 = vector.load %arg16[%c0_60, %c0_61] : memref<1x32xf32, #tpu.memory_space<vmem>>, vector<1x32xf32>
    %123 = vector.broadcast %122 : vector<1x32xf32> to vector<16x32xf32>
    %124 = arith.addf %121, %123 : vector<16x32xf32>
    %125 = arith.truncf %124 : vector<16x32xf32> to vector<16x32xbf16>
    %c0_62 = arith.constant 0 : index
    %c0_63 = arith.constant 0 : index
    %126 = vector.load %arg18[%c0_62, %c0_63] : memref<32x64xbf16, #tpu.memory_space<vmem>>, vector<32x64xbf16>
    %cst_64 = arith.constant dense<0.000000e+00> : vector<16x64xf32>
    %127 = tpu.matmul %125, %126, %cst_64 {dimension_numbers = #tpu.dot_dimension_numbers<[1], [0], [0], [1], [0, 0, 1, 1], [], []>} : vector<16x32xbf16>, vector<32x64xbf16>, vector<16x64xf32> -> vector<16x64xf32>
    %c0_65 = arith.constant 0 : index
    %c0_66 = arith.constant 0 : index
    %128 = vector.load %arg19[%c0_65, %c0_66] : memref<1x64xf32, #tpu.memory_space<vmem>>, vector<1x64xf32>
    %129 = vector.broadcast %128 : vector<1x64xf32> to vector<16x64xf32>
    %130 = arith.addf %127, %129 : vector<16x64xf32>
    %131 = vector.extract_strided_slice %130 {offsets = [0, 0], sizes = [16, 32], strides = [1, 1]} : vector<16x64xf32> to vector<16x32xf32>
    %132 = vector.extract_strided_slice %130 {offsets = [0, 32], sizes = [16, 32], strides = [1, 1]} : vector<16x64xf32> to vector<16x32xf32>
    %c0_67 = arith.constant 0 : index
    %c0_68 = arith.constant 0 : index
    %133 = vector.load %arg17[%c0_67, %c0_68] : memref<1x32xf32, #tpu.memory_space<vmem>>, vector<1x32xf32>
    %134 = arith.truncf %133 : vector<1x32xf32> to vector<1x32xbf16>
    %135 = arith.truncf %131 : vector<16x32xf32> to vector<16x32xbf16>
    %136 = arith.truncf %132 : vector<16x32xf32> to vector<16x32xbf16>
    %137 = vector.extract_strided_slice %134 {offsets = [0, 0], sizes = [1, 8], strides = [1, 1]} : vector<1x32xbf16> to vector<1x8xbf16>
    %138 = vector.extract_strided_slice %135 {offsets = [0, 0], sizes = [16, 8], strides = [1, 1]} : vector<16x32xbf16> to vector<16x8xbf16>
    %cst_69 = arith.constant dense<0.000000e+00> : vector<1x16xf32>
    %139 = tpu.matmul %137, %138, %cst_69 {dimension_numbers = #tpu.dot_dimension_numbers<[1], [1], [0], [0], [0, 0, 1, 0], [], []>} : vector<1x8xbf16>, vector<16x8xbf16>, vector<1x16xf32> -> vector<1x16xf32>
    %140 = arith.addf %139, %26 : vector<1x16xf32>
    %cst_70 = arith.constant dense<0xFF800000> : vector<1xf32>
    %141 = vector.multi_reduction <maximumf>, %140, %cst_70 [1] : vector<1x16xf32> to vector<1xf32>
    %142 = vector.shape_cast %141 : vector<1xf32> to vector<1x1xf32>
    %143 = vector.broadcast %142 : vector<1x1xf32> to vector<1x16xf32>
    %144 = arith.subf %140, %143 : vector<1x16xf32>
    %145 = math.exp %144 : vector<1x16xf32>
    %cst_71 = arith.constant dense<0.000000e+00> : vector<1xf32>
    %146 = vector.multi_reduction <add>, %145, %cst_71 [1] : vector<1x16xf32> to vector<1xf32>
    %147 = vector.shape_cast %146 : vector<1xf32> to vector<1x1xf32>
    %148 = arith.truncf %145 : vector<1x16xf32> to vector<1x16xbf16>
    %149 = vector.extract_strided_slice %136 {offsets = [0, 0], sizes = [16, 8], strides = [1, 1]} : vector<16x32xbf16> to vector<16x8xbf16>
    %cst_72 = arith.constant dense<0.000000e+00> : vector<1x8xf32>
    %150 = tpu.matmul %148, %149, %cst_72 {dimension_numbers = #tpu.dot_dimension_numbers<[1], [0], [0], [1], [0, 0, 1, 1], [], []>} : vector<1x16xbf16>, vector<16x8xbf16>, vector<1x8xf32> -> vector<1x8xf32>
    %151 = tpu.reciprocal %147 {approx = true} : vector<1x1xf32> -> vector<1x1xf32>
    %152 = vector.broadcast %151 : vector<1x1xf32> to vector<1x8xf32>
    %153 = arith.mulf %150, %152 : vector<1x8xf32>
    %154 = vector.extract_strided_slice %134 {offsets = [0, 8], sizes = [1, 8], strides = [1, 1]} : vector<1x32xbf16> to vector<1x8xbf16>
    %155 = vector.extract_strided_slice %135 {offsets = [0, 8], sizes = [16, 8], strides = [1, 1]} : vector<16x32xbf16> to vector<16x8xbf16>
    %cst_73 = arith.constant dense<0.000000e+00> : vector<1x16xf32>
    %156 = tpu.matmul %154, %155, %cst_73 {dimension_numbers = #tpu.dot_dimension_numbers<[1], [1], [0], [0], [0, 0, 1, 0], [], []>} : vector<1x8xbf16>, vector<16x8xbf16>, vector<1x16xf32> -> vector<1x16xf32>
    %157 = arith.addf %156, %26 : vector<1x16xf32>
    %cst_74 = arith.constant dense<0xFF800000> : vector<1xf32>
    %158 = vector.multi_reduction <maximumf>, %157, %cst_74 [1] : vector<1x16xf32> to vector<1xf32>
    %159 = vector.shape_cast %158 : vector<1xf32> to vector<1x1xf32>
    %160 = vector.broadcast %159 : vector<1x1xf32> to vector<1x16xf32>
    %161 = arith.subf %157, %160 : vector<1x16xf32>
    %162 = math.exp %161 : vector<1x16xf32>
    %cst_75 = arith.constant dense<0.000000e+00> : vector<1xf32>
    %163 = vector.multi_reduction <add>, %162, %cst_75 [1] : vector<1x16xf32> to vector<1xf32>
    %164 = vector.shape_cast %163 : vector<1xf32> to vector<1x1xf32>
    %165 = arith.truncf %162 : vector<1x16xf32> to vector<1x16xbf16>
    %166 = vector.extract_strided_slice %136 {offsets = [0, 8], sizes = [16, 8], strides = [1, 1]} : vector<16x32xbf16> to vector<16x8xbf16>
    %cst_76 = arith.constant dense<0.000000e+00> : vector<1x8xf32>
    %167 = tpu.matmul %165, %166, %cst_76 {dimension_numbers = #tpu.dot_dimension_numbers<[1], [0], [0], [1], [0, 0, 1, 1], [], []>} : vector<1x16xbf16>, vector<16x8xbf16>, vector<1x8xf32> -> vector<1x8xf32>
    %168 = tpu.reciprocal %164 {approx = true} : vector<1x1xf32> -> vector<1x1xf32>
    %169 = vector.broadcast %168 : vector<1x1xf32> to vector<1x8xf32>
    %170 = arith.mulf %167, %169 : vector<1x8xf32>
    %171 = vector.extract_strided_slice %134 {offsets = [0, 16], sizes = [1, 8], strides = [1, 1]} : vector<1x32xbf16> to vector<1x8xbf16>
    %172 = vector.extract_strided_slice %135 {offsets = [0, 16], sizes = [16, 8], strides = [1, 1]} : vector<16x32xbf16> to vector<16x8xbf16>
    %cst_77 = arith.constant dense<0.000000e+00> : vector<1x16xf32>
    %173 = tpu.matmul %171, %172, %cst_77 {dimension_numbers = #tpu.dot_dimension_numbers<[1], [1], [0], [0], [0, 0, 1, 0], [], []>} : vector<1x8xbf16>, vector<16x8xbf16>, vector<1x16xf32> -> vector<1x16xf32>
    %174 = arith.addf %173, %26 : vector<1x16xf32>
    %cst_78 = arith.constant dense<0xFF800000> : vector<1xf32>
    %175 = vector.multi_reduction <maximumf>, %174, %cst_78 [1] : vector<1x16xf32> to vector<1xf32>
    %176 = vector.shape_cast %175 : vector<1xf32> to vector<1x1xf32>
    %177 = vector.broadcast %176 : vector<1x1xf32> to vector<1x16xf32>
    %178 = arith.subf %174, %177 : vector<1x16xf32>
    %179 = math.exp %178 : vector<1x16xf32>
    %cst_79 = arith.constant dense<0.000000e+00> : vector<1xf32>
    %180 = vector.multi_reduction <add>, %179, %cst_79 [1] : vector<1x16xf32> to vector<1xf32>
    %181 = vector.shape_cast %180 : vector<1xf32> to vector<1x1xf32>
    %182 = arith.truncf %179 : vector<1x16xf32> to vector<1x16xbf16>
    %183 = vector.extract_strided_slice %136 {offsets = [0, 16], sizes = [16, 8], strides = [1, 1]} : vector<16x32xbf16> to vector<16x8xbf16>
    %cst_80 = arith.constant dense<0.000000e+00> : vector<1x8xf32>
    %184 = tpu.matmul %182, %183, %cst_80 {dimension_numbers = #tpu.dot_dimension_numbers<[1], [0], [0], [1], [0, 0, 1, 1], [], []>} : vector<1x16xbf16>, vector<16x8xbf16>, vector<1x8xf32> -> vector<1x8xf32>
    %185 = tpu.reciprocal %181 {approx = true} : vector<1x1xf32> -> vector<1x1xf32>
    %186 = vector.broadcast %185 : vector<1x1xf32> to vector<1x8xf32>
    %187 = arith.mulf %184, %186 : vector<1x8xf32>
    %188 = vector.extract_strided_slice %134 {offsets = [0, 24], sizes = [1, 8], strides = [1, 1]} : vector<1x32xbf16> to vector<1x8xbf16>
    %189 = vector.extract_strided_slice %135 {offsets = [0, 24], sizes = [16, 8], strides = [1, 1]} : vector<16x32xbf16> to vector<16x8xbf16>
    %cst_81 = arith.constant dense<0.000000e+00> : vector<1x16xf32>
    %190 = tpu.matmul %188, %189, %cst_81 {dimension_numbers = #tpu.dot_dimension_numbers<[1], [1], [0], [0], [0, 0, 1, 0], [], []>} : vector<1x8xbf16>, vector<16x8xbf16>, vector<1x16xf32> -> vector<1x16xf32>
    %191 = arith.addf %190, %26 : vector<1x16xf32>
    %cst_82 = arith.constant dense<0xFF800000> : vector<1xf32>
    %192 = vector.multi_reduction <maximumf>, %191, %cst_82 [1] : vector<1x16xf32> to vector<1xf32>
    %193 = vector.shape_cast %192 : vector<1xf32> to vector<1x1xf32>
    %194 = vector.broadcast %193 : vector<1x1xf32> to vector<1x16xf32>
    %195 = arith.subf %191, %194 : vector<1x16xf32>
    %196 = math.exp %195 : vector<1x16xf32>
    %cst_83 = arith.constant dense<0.000000e+00> : vector<1xf32>
    %197 = vector.multi_reduction <add>, %196, %cst_83 [1] : vector<1x16xf32> to vector<1xf32>
    %198 = vector.shape_cast %197 : vector<1xf32> to vector<1x1xf32>
    %199 = arith.truncf %196 : vector<1x16xf32> to vector<1x16xbf16>
    %200 = vector.extract_strided_slice %136 {offsets = [0, 24], sizes = [16, 8], strides = [1, 1]} : vector<16x32xbf16> to vector<16x8xbf16>
    %cst_84 = arith.constant dense<0.000000e+00> : vector<1x8xf32>
    %201 = tpu.matmul %199, %200, %cst_84 {dimension_numbers = #tpu.dot_dimension_numbers<[1], [0], [0], [1], [0, 0, 1, 1], [], []>} : vector<1x16xbf16>, vector<16x8xbf16>, vector<1x8xf32> -> vector<1x8xf32>
    %202 = tpu.reciprocal %198 {approx = true} : vector<1x1xf32> -> vector<1x1xf32>
    %203 = vector.broadcast %202 : vector<1x1xf32> to vector<1x8xf32>
    %204 = arith.mulf %201, %203 : vector<1x8xf32>
    %205 = tpu.concatenate %153, %170, %187, %204 in 1 : vector<1x8xf32>, vector<1x8xf32>, vector<1x8xf32>, vector<1x8xf32> -> vector<1x32xf32>
    %206 = arith.truncf %205 : vector<1x32xf32> to vector<1x32xbf16>
    %c0_85 = arith.constant 0 : index
    %c0_86 = arith.constant 0 : index
    %207 = vector.load %arg20[%c0_85, %c0_86] : memref<32x32xbf16, #tpu.memory_space<vmem>>, vector<32x32xbf16>
    %cst_87 = arith.constant dense<0.000000e+00> : vector<1x32xf32>
    %208 = tpu.matmul %206, %207, %cst_87 {dimension_numbers = #tpu.dot_dimension_numbers<[1], [0], [0], [1], [0, 0, 1, 1], [], []>} : vector<1x32xbf16>, vector<32x32xbf16>, vector<1x32xf32> -> vector<1x32xf32>
    %c0_88 = arith.constant 0 : index
    %c0_89 = arith.constant 0 : index
    %209 = vector.load %arg21[%c0_88, %c0_89] : memref<1x32xf32, #tpu.memory_space<vmem>>, vector<1x32xf32>
    %210 = arith.addf %208, %209 : vector<1x32xf32>
    %c0_90 = arith.constant 0 : index
    %c0_91 = arith.constant 0 : index
    %c0_92 = arith.constant 0 : index
    %211 = vector.load %arg22[%c0_90, %c0_91, %c0_92] : memref<1x1x32xf32, #tpu.memory_space<vmem>>, vector<1x1x32xf32>
    %212 = vector.shape_cast %211 : vector<1x1x32xf32> to vector<1x32xf32>
    %213 = vector.shape_cast %210 : vector<1x32xf32> to vector<1x1x32xf32>
    tpu.vector_store %arg22[%c0_90, %c0_91, %c0_92], %213 {strides = array<i32>} : memref<1x1x32xf32, #tpu.memory_space<vmem>>, vector<1x1x32xf32>,
    return
  }
  func.func @transform_0(%arg0: i32) -> (i32, i32, i32) {
    %c0_i32 = arith.constant 0 : i32
    %c0_i32_0 = arith.constant 0 : i32
    %c0_i32_1 = arith.constant 0 : i32
    %c0_i32_2 = arith.constant 0 : i32
    return %c0_i32, %c0_i32_0, %c0_i32_1 : i32, i32, i32
  }
  func.func @transform_1(%arg0: i32) -> (i32, i32, i32) {
    %c0_i32 = arith.constant 0 : i32
    %c0_i32_0 = arith.constant 0 : i32
    %c0_i32_1 = arith.constant 0 : i32
    %c0_i32_2 = arith.constant 0 : i32
    return %c0_i32, %c0_i32_0, %c0_i32_1 : i32, i32, i32
  }
  func.func @transform_2(%arg0: i32) -> (i32, i32, i32) {
    %c0_i32 = arith.constant 0 : i32
    %c0_i32_0 = arith.constant 0 : i32
    %c0_i32_1 = arith.constant 0 : i32
    %c0_i32_2 = arith.constant 0 : i32
    return %c0_i32, %c0_i32_0, %c0_i32_1 : i32, i32, i32
  }
  func.func @transform_3(%arg0: i32) -> (i32, i32, i32) {
    %c0_i32 = arith.constant 0 : i32
    %c0_i32_0 = arith.constant 0 : i32
    %c0_i32_1 = arith.constant 0 : i32
    return %arg0, %c0_i32, %c0_i32_0 : i32, i32, i32
  }
  func.func @transform_4(%arg0: i32) -> (i32, i32, i32) {
    %c0_i32 = arith.constant 0 : i32
    %c0_i32_0 = arith.constant 0 : i32
    %c0_i32_1 = arith.constant 0 : i32
    return %arg0, %c0_i32, %c0_i32_0 : i32, i32, i32
  }
  func.func @transform_5(%arg0: i32) -> (i32, i32, i32) {
    %c0_i32 = arith.constant 0 : i32
    %c0_i32_0 = arith.constant 0 : i32
    %c0_i32_1 = arith.constant 0 : i32
    return %arg0, %c0_i32, %c0_i32_0 : i32, i32, i32
  }
  func.func @transform_6(%arg0: i32) -> (i32, i32, i32) {
    %c0_i32 = arith.constant 0 : i32
    %c0_i32_0 = arith.constant 0 : i32
    %c0_i32_1 = arith.constant 0 : i32
    return %arg0, %c0_i32, %c0_i32_0 : i32, i32, i32
  }
  func.func @transform_7(%arg0: i32) -> (i32, i32, i32) {
    %c0_i32 = arith.constant 0 : i32
    %c0_i32_0 = arith.constant 0 : i32
    %c0_i32_1 = arith.constant 0 : i32
    return %arg0, %c0_i32, %c0_i32_0 : i32, i32, i32
  }
  func.func @transform_8(%arg0: i32) -> (i32, i32) {
    %c0_i32 = arith.constant 0 : i32
    %c0_i32_0 = arith.constant 0 : i32
    %c0_i32_1 = arith.constant 0 : i32
    return %c0_i32, %c0_i32_0 : i32, i32
  }
  func.func @transform_9(%arg0: i32) -> (i32, i32) {
    %c0_i32 = arith.constant 0 : i32
    %c0_i32_0 = arith.constant 0 : i32
    %c0_i32_1 = arith.constant 0 : i32
    return %c0_i32, %c0_i32_0 : i32, i32
  }
  func.func @transform_10(%arg0: i32) -> (i32, i32) {
    %c0_i32 = arith.constant 0 : i32
    %c0_i32_0 = arith.constant 0 : i32
    %c0_i32_1 = arith.constant 0 : i32
    return %c0_i32, %c0_i32_0 : i32, i32
  }
  func.func @transform_11(%arg0: i32) -> (i32, i32) {
    %c0_i32 = arith.constant 0 : i32
    %c0_i32_0 = arith.constant 0 : i32
    %c0_i32_1 = arith.constant 0 : i32
    return %c0_i32, %c0_i32_0 : i32, i32
  }
  func.func @transform_12(%arg0: i32) -> (i32, i32) {
    %c0_i32 = arith.constant 0 : i32
    %c0_i32_0 = arith.constant 0 : i32
    %c0_i32_1 = arith.constant 0 : i32
    return %c0_i32, %c0_i32_0 : i32, i32
  }
  func.func @transform_13(%arg0: i32) -> (i32, i32) {
    %c0_i32 = arith.constant 0 : i32
    %c0_i32_0 = arith.constant 0 : i32
    %c0_i32_1 = arith.constant 0 : i32
    return %c0_i32, %c0_i32_0 : i32, i32
  }
  func.func @transform_14(%arg0: i32) -> (i32, i32) {
    %c0_i32 = arith.constant 0 : i32
    %c0_i32_0 = arith.constant 0 : i32
    %c0_i32_1 = arith.constant 0 : i32
    return %c0_i32, %c0_i32_0 : i32, i32
  }
  func.func @transform_15(%arg0: i32) -> (i32, i32) {
    %c0_i32 = arith.constant 0 : i32
    %c0_i32_0 = arith.constant 0 : i32
    %c0_i32_1 = arith.constant 0 : i32
    return %c0_i32, %c0_i32_0 : i32, i32
  }
  func.func @transform_16(%arg0: i32) -> (i32, i32) {
    %c0_i32 = arith.constant 0 : i32
    %c0_i32_0 = arith.constant 0 : i32
    %c0_i32_1 = arith.constant 0 : i32
    return %c0_i32, %c0_i32_0 : i32, i32
  }
  func.func @transform_17(%arg0: i32) -> (i32, i32) {
    %c0_i32 = arith.constant 0 : i32
    %c0_i32_0 = arith.constant 0 : i32
    %c0_i32_1 = arith.constant 0 : i32
    return %c0_i32, %c0_i32_0 : i32, i32
  }
  func.func @transform_18(%arg0: i32) -> (i32, i32) {
    %c0_i32 = arith.constant 0 : i32
    %c0_i32_0 = arith.constant 0 : i32
    %c0_i32_1 = arith.constant 0 : i32
    return %c0_i32, %c0_i32_0 : i32, i32
  }
  func.func @transform_19(%arg0: i32) -> (i32, i32) {
    %c0_i32 = arith.constant 0 : i32
    %c0_i32_0 = arith.constant 0 : i32
    %c0_i32_1 = arith.constant 0 : i32
    return %c0_i32, %c0_i32_0 : i32, i32
  }
  func.func @transform_20(%arg0: i32) -> (i32, i32) {
    %c0_i32 = arith.constant 0 : i32
    %c0_i32_0 = arith.constant 0 : i32
    %c0_i32_1 = arith.constant 0 : i32
    return %c0_i32, %c0_i32_0 : i32, i32
  }
  func.func @transform_21(%arg0: i32) -> (i32, i32, i32) {
    %c0_i32 = arith.constant 0 : i32
    %c0_i32_0 = arith.constant 0 : i32
    %c0_i32_1 = arith.constant 0 : i32
    return %arg0, %c0_i32, %c0_i32_0 : i32, i32, i32
  }
}

</mosaic_0001>

<llo_original>
// kernel: attention_with_learnable_embedding.1
$region0: #{attention_with_learnable_embedding.1}
  #allocation0 [shape = 'u32[]', space=smem, size = 0x4, offset = 0x4, fixed_abs, tag = 'smem constant byte address 0x4 - core index']
  #allocation1 [shape = 'u32[144,128]{1,0:T(1,128)}', space=vmem, size = 0x12000, scoped, tag = 'internal scratch']
  %s0 = inlined_call_operand.vmem [shape: f32[1,8,32], index: 0, kind: input, shape index: {}]
  %s1 = inlined_call_operand.vmem [shape: f32[1,8,32], index: 1, kind: input, shape index: {}]
  %s2 = inlined_call_operand.vmem [shape: f32[1,8,16], index: 2, kind: input, shape index: {}]
  %s3 = inlined_call_operand.vmem [shape: f32[2,8,32], index: 3, kind: input, shape index: {}]
  %s4 = inlined_call_operand.vmem [shape: f32[2,8,32], index: 4, kind: input, shape index: {}]
  %s5 = inlined_call_operand.vmem [shape: f32[2,8,16], index: 5, kind: input, shape index: {}]
  %s6 = inlined_call_operand.vmem [shape: f32[2,1,16], index: 6, kind: input, shape index: {}]
  %s7 = inlined_call_operand.vmem [shape: f32[2,1,16], index: 7, kind: input, shape index: {}]
  %s8 = inlined_call_operand.vmem [shape: bf16[32,32], index: 8, kind: input, shape index: {}]
  %s9 = inlined_call_operand.vmem [shape: f32[1,32], index: 9, kind: input, shape index: {}]
  %s10 = inlined_call_operand.vmem [shape: bf16[32,32], index: 10, kind: input, shape index: {}]
  %s11 = inlined_call_operand.vmem [shape: f32[1,32], index: 11, kind: input, shape index: {}]
  %s12 = inlined_call_operand.vmem [shape: bf16[16,32], index: 12, kind: input, shape index: {}]
  %s13 = inlined_call_operand.vmem [shape: f32[1,32], index: 13, kind: input, shape index: {}]
  %s14 = inlined_call_operand.vmem [shape: bf16[32,32], index: 14, kind: input, shape index: {}]
  %s15 = inlined_call_operand.vmem [shape: f32[1,32], index: 15, kind: input, shape index: {}]
  %s16 = inlined_call_operand.vmem [shape: f32[1,32], index: 16, kind: input, shape index: {}]
  %s17 = inlined_call_operand.vmem [shape: bf16[32,64], index: 17, kind: input, shape index: {}]
  %s18 = inlined_call_operand.vmem [shape: f32[1,64], index: 18, kind: input, shape index: {}]
  %s19 = inlined_call_operand.vmem [shape: bf16[32,32], index: 19, kind: input, shape index: {}]
  %s20 = inlined_call_operand.vmem [shape: f32[1,32], index: 20, kind: input, shape index: {}]
  %s21 = inlined_call_operand.hbm [shape: f32[2,1,32], index: 21, kind: output, shape index: {}]
  %s22 = sld [smem:[#allocation0]]
  $region117: #{attention_with_learnable_embedding.1} parent=0
    _
  %s24 = ssub.s32 1, %s22
  %s25 = scalar_select 0, %s24, %s22
  $region1: #{attention_with_learnable_embedding.1} parent=0
    #allocation2 [shape = 'u8[1024]{0}', space=vmem, size = 0x400, scoped, tag = 'output window, operand 0']
    #allocation3 [shape = 's32[2]{0}', space=sflag, size = 0x8, scoped, tag = 'scoped memory for attention_with_learnable_embedding.1']
    %26 = vsyncpa [#allocation3], 0
    %s27 = scalar_lea.sflag [#allocation3], 1
    %28 = vsyncpa %s27, 0
    loop: start=0, step=1, limit=4
    $region2: #{attention_with_learnable_embedding.1} parent=1 // loop_pre_header
      _
    $region3: #{attention_with_learnable_embedding.1} parent=1 // loop_header
      %s30 = sphi 0, %s34
      %p31 = scmp.ge.s32.totalorder %s30, 4
      %s38 = sphi 0, %s38
      %s40 = sphi 0, %s38
      %s41 = sphi 0, %s40
      %s55 = sphi 0, %s41
      %s59 = sphi 0, %s59
      %s61 = sphi 0, %s59
      %s62 = sphi 0, %s61
      %s76 = sphi 0, %s62
      %s80 = sphi 0, %s80
      %s82 = sphi 0, %s80
      %s83 = sphi 0, %s82
      %s97 = sphi 0, %s83
      %s103 = sphi 0, %s105
      %s106 = sphi 0, %s103
      %s107 = sphi 0, %s106
      %s123 = sphi 0, %s107
      %s129 = sphi 0, %s131
      %s132 = sphi 0, %s129
      %s133 = sphi 0, %s132
      %s149 = sphi 0, %s133
      %s155 = sphi 0, %s157
      %s158 = sphi 0, %s155
      %s159 = sphi 0, %s158
      %s175 = sphi 0, %s159
      %s181 = sphi 0, %s183
      %s184 = sphi 0, %s181
      %s185 = sphi 0, %s184
      %s201 = sphi 0, %s185
      %s207 = sphi 0, %s209
      %s210 = sphi 0, %s207
      %s211 = sphi 0, %s210
      %s227 = sphi 0, %s211
      %s231 = sphi 0, %s231
      %s233 = sphi 0, %s231
      %s234 = sphi 0, %s233
      %s248 = sphi 0, %s234
      %s252 = sphi 0, %s252
      %s254 = sphi 0, %s252
      %s255 = sphi 0, %s254
      %s269 = sphi 0, %s255
      %s273 = sphi 0, %s273
      %s275 = sphi 0, %s273
      %s276 = sphi 0, %s275
      %s290 = sphi 0, %s276
      %s294 = sphi 0, %s294
      %s296 = sphi 0, %s294
      %s297 = sphi 0, %s296
      %s311 = sphi 0, %s297
      %s315 = sphi 0, %s315
      %s317 = sphi 0, %s315
      %s318 = sphi 0, %s317
      %s332 = sphi 0, %s318
      %s336 = sphi 0, %s336
      %s338 = sphi 0, %s336
      %s339 = sphi 0, %s338
      %s353 = sphi 0, %s339
      %s357 = sphi 0, %s357
      %s359 = sphi 0, %s357
      %s360 = sphi 0, %s359
      %s374 = sphi 0, %s360
      %s378 = sphi 0, %s378
      %s380 = sphi 0, %s378
      %s381 = sphi 0, %s380
      %s395 = sphi 0, %s381
      %s399 = sphi 0, %s399
      %s401 = sphi 0, %s399
      %s402 = sphi 0, %s401
      %s416 = sphi 0, %s402
      %s420 = sphi 0, %s420
      %s422 = sphi 0, %s420
      %s423 = sphi 0, %s422
      %s437 = sphi 0, %s423
      %s441 = sphi 0, %s441
      %s443 = sphi 0, %s441
      %s444 = sphi 0, %s443
      %s458 = sphi 0, %s444
      %s462 = sphi 0, %s462
      %s464 = sphi 0, %s462
      %s465 = sphi 0, %s464
      %s479 = sphi 0, %s465
      %s483 = sphi 0, %s483
      %s485 = sphi 0, %s483
      %s486 = sphi 0, %s485
      %s500 = sphi 0, %s486
      %s506 = sphi 0, %s508
      %s509 = sphi 0, %s506
      %s510 = sphi 0, %s509
      %s526 = sphi 0, %s510
    $region4: #{attention_with_learnable_embedding.1} parent=1 // loop_header_branch
      %33 = sbr.rel (%p31) target = $region8
    $region5: #{attention_with_learnable_embedding.1} parent=1 // loop_body
      %s35 = ssub.s32 %s30, 1
      %s36 = ssub.s32 %s30, 2
      %s37 = sadd.s32 %s30, 1
      %s39 = sadd.s32 %s38, 1
      %p42 = scmp.eq.s32.totalorder %s30, 1
      %p43 = scmp.ne.s32.totalorder %s38, %s40
      %p44 = scmp.eq.s32.totalorder %s30, 0
      %p45 = por %p43, %p44
      %p46 = scmp.ne.s32.totalorder %s38, %s40
      %p47 = scmp.eq.s32.totalorder %s35, 1
      %p48 = por %p46, %p47
      %p49 = scmp.ne.s32.totalorder %s40, %s41
      %p50 = scmp.eq.s32.totalorder %s35, 0
      %p51 = por %p49, %p50
      %p52 = scmp.ne.s32.totalorder %s40, %s41
      %p53 = scmp.eq.s32.totalorder %s36, 1
      %p54 = por %p52, %p53
      %p56 = scmp.ne.s32.totalorder %s41, %s55
      %p57 = scmp.eq.s32.totalorder %s36, 0
      %p58 = por %p56, %p57
      %s60 = sadd.s32 %s59, 1
      %p63 = scmp.eq.s32.totalorder %s30, 1
      %p64 = scmp.ne.s32.totalorder %s59, %s61
      %p65 = scmp.eq.s32.totalorder %s30, 0
      %p66 = por %p64, %p65
      %p67 = scmp.ne.s32.totalorder %s59, %s61
      %p68 = scmp.eq.s32.totalorder %s35, 1
      %p69 = por %p67, %p68
      %p70 = scmp.ne.s32.totalorder %s61, %s62
      %p71 = scmp.eq.s32.totalorder %s35, 0
      %p72 = por %p70, %p71
      %p73 = scmp.ne.s32.totalorder %s61, %s62
      %p74 = scmp.eq.s32.totalorder %s36, 1
      %p75 = por %p73, %p74
      %p77 = scmp.ne.s32.totalorder %s62, %s76
      %p78 = scmp.eq.s32.totalorder %s36, 0
      %p79 = por %p77, %p78
      %s81 = sadd.s32 %s80, 1
      %p84 = scmp.eq.s32.totalorder %s30, 1
      %p85 = scmp.ne.s32.totalorder %s80, %s82
      %p86 = scmp.eq.s32.totalorder %s30, 0
      %p87 = por %p85, %p86
      %p88 = scmp.ne.s32.totalorder %s80, %s82
      %p89 = scmp.eq.s32.totalorder %s35, 1
      %p90 = por %p88, %p89
      %p91 = scmp.ne.s32.totalorder %s82, %s83
      %p92 = scmp.eq.s32.totalorder %s35, 0
      %p93 = por %p91, %p92
      %p94 = scmp.ne.s32.totalorder %s82, %s83
      %p95 = scmp.eq.s32.totalorder %s36, 1
      %p96 = por %p94, %p95
      %p98 = scmp.ne.s32.totalorder %s83, %s97
      %p99 = scmp.eq.s32.totalorder %s36, 0
      %p100 = por %p98, %p99
      %s101 = ssub.s32 %s30, %s37
      %p102 = scmp.eq.s32.totalorder %s101, 0
      %s104 = sadd.s32 %s103, 1
      %s105 = scalar_select %p102, %s103, %s104
      %p108 = pneg %p102
      %p109 = scmp.eq.s32.totalorder %s30, 1
      %p110 = por %p108, %p109
      %p111 = scmp.ne.s32.totalorder %s103, %s106
      %p112 = scmp.eq.s32.totalorder %s30, 0
      %p113 = por %p111, %p112
      %p114 = scmp.ne.s32.totalorder %s103, %s106
      %p115 = scmp.eq.s32.totalorder %s35, 1
      %p116 = por %p114, %p115
      %p117 = scmp.ne.s32.totalorder %s106, %s107
      %p118 = scmp.eq.s32.totalorder %s35, 0
      %p119 = por %p117, %p118
      %p120 = scmp.ne.s32.totalorder %s106, %s107
      %p121 = scmp.eq.s32.totalorder %s36, 1
      %p122 = por %p120, %p121
      %p124 = scmp.ne.s32.totalorder %s107, %s123
      %p125 = scmp.eq.s32.totalorder %s36, 0
      %p126 = por %p124, %p125
      %s127 = ssub.s32 %s30, %s37
      %p128 = scmp.eq.s32.totalorder %s127, 0
      %s130 = sadd.s32 %s129, 1
      %s131 = scalar_select %p128, %s129, %s130
      %p134 = pneg %p128
      %p135 = scmp.eq.s32.totalorder %s30, 1
      %p136 = por %p134, %p135
      %p137 = scmp.ne.s32.totalorder %s129, %s132
      %p138 = scmp.eq.s32.totalorder %s30, 0
      %p139 = por %p137, %p138
      %p140 = scmp.ne.s32.totalorder %s129, %s132
      %p141 = scmp.eq.s32.totalorder %s35, 1
      %p142 = por %p140, %p141
      %p143 = scmp.ne.s32.totalorder %s132, %s133
      %p144 = scmp.eq.s32.totalorder %s35, 0
      %p145 = por %p143, %p144
      %p146 = scmp.ne.s32.totalorder %s132, %s133
      %p147 = scmp.eq.s32.totalorder %s36, 1
      %p148 = por %p146, %p147
      %p150 = scmp.ne.s32.totalorder %s133, %s149
      %p151 = scmp.eq.s32.totalorder %s36, 0
      %p152 = por %p150, %p151
      %s153 = ssub.s32 %s30, %s37
      %p154 = scmp.eq.s32.totalorder %s153, 0
      %s156 = sadd.s32 %s155, 1
      %s157 = scalar_select %p154, %s155, %s156
      %p160 = pneg %p154
      %p161 = scmp.eq.s32.totalorder %s30, 1
      %p162 = por %p160, %p161
      %p163 = scmp.ne.s32.totalorder %s155, %s158
      %p164 = scmp.eq.s32.totalorder %s30, 0
      %p165 = por %p163, %p164
      %p166 = scmp.ne.s32.totalorder %s155, %s158
      %p167 = scmp.eq.s32.totalorder %s35, 1
      %p168 = por %p166, %p167
      %p169 = scmp.ne.s32.totalorder %s158, %s159
      %p170 = scmp.eq.s32.totalorder %s35, 0
      %p171 = por %p169, %p170
      %p172 = scmp.ne.s32.totalorder %s158, %s159
      %p173 = scmp.eq.s32.totalorder %s36, 1
      %p174 = por %p172, %p173
      %p176 = scmp.ne.s32.totalorder %s159, %s175
      %p177 = scmp.eq.s32.totalorder %s36, 0
      %p178 = por %p176, %p177
      %s179 = ssub.s32 %s30, %s37
      %p180 = scmp.eq.s32.totalorder %s179, 0
      %s182 = sadd.s32 %s181, 1
      %s183 = scalar_select %p180, %s181, %s182
      %p186 = pneg %p180
      %p187 = scmp.eq.s32.totalorder %s30, 1
      %p188 = por %p186, %p187
      %p189 = scmp.ne.s32.totalorder %s181, %s184
      %p190 = scmp.eq.s32.totalorder %s30, 0
      %p191 = por %p189, %p190
      %p192 = scmp.ne.s32.totalorder %s181, %s184
      %p193 = scmp.eq.s32.totalorder %s35, 1
      %p194 = por %p192, %p193
      %p195 = scmp.ne.s32.totalorder %s184, %s185
      %p196 = scmp.eq.s32.totalorder %s35, 0
      %p197 = por %p195, %p196
      %p198 = scmp.ne.s32.totalorder %s184, %s185
      %p199 = scmp.eq.s32.totalorder %s36, 1
      %p200 = por %p198, %p199
      %p202 = scmp.ne.s32.totalorder %s185, %s201
      %p203 = scmp.eq.s32.totalorder %s36, 0
      %p204 = por %p202, %p203
      %s205 = ssub.s32 %s30, %s37
      %p206 = scmp.eq.s32.totalorder %s205, 0
      %s208 = sadd.s32 %s207, 1
      %s209 = scalar_select %p206, %s207, %s208
      %p212 = pneg %p206
      %p213 = scmp.eq.s32.totalorder %s30, 1
      %p214 = por %p212, %p213
      %p215 = scmp.ne.s32.totalorder %s207, %s210
      %p216 = scmp.eq.s32.totalorder %s30, 0
      %p217 = por %p215, %p216
      %p218 = scmp.ne.s32.totalorder %s207, %s210
      %p219 = scmp.eq.s32.totalorder %s35, 1
      %p220 = por %p218, %p219
      %p221 = scmp.ne.s32.totalorder %s210, %s211
      %p222 = scmp.eq.s32.totalorder %s35, 0
      %p223 = por %p221, %p222
      %p224 = scmp.ne.s32.totalorder %s210, %s211
      %p225 = scmp.eq.s32.totalorder %s36, 1
      %p226 = por %p224, %p225
      %p228 = scmp.ne.s32.totalorder %s211, %s227
      %p229 = scmp.eq.s32.totalorder %s36, 0
      %p230 = por %p228, %p229
      %s232 = sadd.s32 %s231, 1
      %p235 = scmp.eq.s32.totalorder %s30, 1
      %p236 = scmp.ne.s32.totalorder %s231, %s233
      %p237 = scmp.eq.s32.totalorder %s30, 0
      %p238 = por %p236, %p237
      %p239 = scmp.ne.s32.totalorder %s231, %s233
      %p240 = scmp.eq.s32.totalorder %s35, 1
      %p241 = por %p239, %p240
      %p242 = scmp.ne.s32.totalorder %s233, %s234
      %p243 = scmp.eq.s32.totalorder %s35, 0
      %p244 = por %p242, %p243
      %p245 = scmp.ne.s32.totalorder %s233, %s234
      %p246 = scmp.eq.s32.totalorder %s36, 1
      %p247 = por %p245, %p246
      %p249 = scmp.ne.s32.totalorder %s234, %s248
      %p250 = scmp.eq.s32.totalorder %s36, 0
      %p251 = por %p249, %p250
      %s253 = sadd.s32 %s252, 1
      %p256 = scmp.eq.s32.totalorder %s30, 1
      %p257 = scmp.ne.s32.totalorder %s252, %s254
      %p258 = scmp.eq.s32.totalorder %s30, 0
      %p259 = por %p257, %p258
      %p260 = scmp.ne.s32.totalorder %s252, %s254
      %p261 = scmp.eq.s32.totalorder %s35, 1
      %p262 = por %p260, %p261
      %p263 = scmp.ne.s32.totalorder %s254, %s255
      %p264 = scmp.eq.s32.totalorder %s35, 0
      %p265 = por %p263, %p264
      %p266 = scmp.ne.s32.totalorder %s254, %s255
      %p267 = scmp.eq.s32.totalorder %s36, 1
      %p268 = por %p266, %p267
      %p270 = scmp.ne.s32.totalorder %s255, %s269
      %p271 = scmp.eq.s32.totalorder %s36, 0
      %p272 = por %p270, %p271
      %s274 = sadd.s32 %s273, 1
      %p277 = scmp.eq.s32.totalorder %s30, 1
      %p278 = scmp.ne.s32.totalorder %s273, %s275
      %p279 = scmp.eq.s32.totalorder %s30, 0
      %p280 = por %p278, %p279
      %p281 = scmp.ne.s32.totalorder %s273, %s275
      %p282 = scmp.eq.s32.totalorder %s35, 1
      %p283 = por %p281, %p282
      %p284 = scmp.ne.s32.totalorder %s275, %s276
      %p285 = scmp.eq.s32.totalorder %s35, 0
      %p286 = por %p284, %p285
      %p287 = scmp.ne.s32.totalorder %s275, %s276
      %p288 = scmp.eq.s32.totalorder %s36, 1
      %p289 = por %p287, %p288
      %p291 = scmp.ne.s32.totalorder %s276, %s290
      %p292 = scmp.eq.s32.totalorder %s36, 0
      %p293 = por %p291, %p292
      %s295 = sadd.s32 %s294, 1
      %p298 = scmp.eq.s32.totalorder %s30, 1
      %p299 = scmp.ne.s32.totalorder %s294, %s296
      %p300 = scmp.eq.s32.totalorder %s30, 0
      %p301 = por %p299, %p300
      %p302 = scmp.ne.s32.totalorder %s294, %s296
      %p303 = scmp.eq.s32.totalorder %s35, 1
      %p304 = por %p302, %p303
      %p305 = scmp.ne.s32.totalorder %s296, %s297
      %p306 = scmp.eq.s32.totalorder %s35, 0
      %p307 = por %p305, %p306
      %p308 = scmp.ne.s32.totalorder %s296, %s297
      %p309 = scmp.eq.s32.totalorder %s36, 1
      %p310 = por %p308, %p309
      %p312 = scmp.ne.s32.totalorder %s297, %s311
      %p313 = scmp.eq.s32.totalorder %s36, 0
      %p314 = por %p312, %p313
      %s316 = sadd.s32 %s315, 1
      %p319 = scmp.eq.s32.totalorder %s30, 1
      %p320 = scmp.ne.s32.totalorder %s315, %s317
      %p321 = scmp.eq.s32.totalorder %s30, 0
      %p322 = por %p320, %p321
      %p323 = scmp.ne.s32.totalorder %s315, %s317
      %p324 = scmp.eq.s32.totalorder %s35, 1
      %p325 = por %p323, %p324
      %p326 = scmp.ne.s32.totalorder %s317, %s318
      %p327 = scmp.eq.s32.totalorder %s35, 0
      %p328 = por %p326, %p327
      %p329 = scmp.ne.s32.totalorder %s317, %s318
      %p330 = scmp.eq.s32.totalorder %s36, 1
      %p331 = por %p329, %p330
      %p333 = scmp.ne.s32.totalorder %s318, %s332
      %p334 = scmp.eq.s32.totalorder %s36, 0
      %p335 = por %p333, %p334
      %s337 = sadd.s32 %s336, 1
      %p340 = scmp.eq.s32.totalorder %s30, 1
      %p341 = scmp.ne.s32.totalorder %s336, %s338
      %p342 = scmp.eq.s32.totalorder %s30, 0
      %p343 = por %p341, %p342
      %p344 = scmp.ne.s32.totalorder %s336, %s338
      %p345 = scmp.eq.s32.totalorder %s35, 1
      %p346 = por %p344, %p345
      %p347 = scmp.ne.s32.totalorder %s338, %s339
      %p348 = scmp.eq.s32.totalorder %s35, 0
      %p349 = por %p347, %p348
      %p350 = scmp.ne.s32.totalorder %s338, %s339
      %p351 = scmp.eq.s32.totalorder %s36, 1
      %p352 = por %p350, %p351
      %p354 = scmp.ne.s32.totalorder %s339, %s353
      %p355 = scmp.eq.s32.totalorder %s36, 0
      %p356 = por %p354, %p355
      %s358 = sadd.s32 %s357, 1
      %p361 = scmp.eq.s32.totalorder %s30, 1
      %p362 = scmp.ne.s32.totalorder %s357, %s359
      %p363 = scmp.eq.s32.totalorder %s30, 0
      %p364 = por %p362, %p363
      %p365 = scmp.ne.s32.totalorder %s357, %s359
      %p366 = scmp.eq.s32.totalorder %s35, 1
      %p367 = por %p365, %p366
      %p368 = scmp.ne.s32.totalorder %s359, %s360
      %p369 = scmp.eq.s32.totalorder %s35, 0
      %p370 = por %p368, %p369
      %p371 = scmp.ne.s32.totalorder %s359, %s360
      %p372 = scmp.eq.s32.totalorder %s36, 1
      %p373 = por %p371, %p372
      %p375 = scmp.ne.s32.totalorder %s360, %s374
      %p376 = scmp.eq.s32.totalorder %s36, 0
      %p377 = por %p375, %p376
      %s379 = sadd.s32 %s378, 1
      %p382 = scmp.eq.s32.totalorder %s30, 1
      %p383 = scmp.ne.s32.totalorder %s378, %s380
      %p384 = scmp.eq.s32.totalorder %s30, 0
      %p385 = por %p383, %p384
      %p386 = scmp.ne.s32.totalorder %s378, %s380
      %p387 = scmp.eq.s32.totalorder %s35, 1
      %p388 = por %p386, %p387
      %p389 = scmp.ne.s32.totalorder %s380, %s381
      %p390 = scmp.eq.s32.totalorder %s35, 0
      %p391 = por %p389, %p390
      %p392 = scmp.ne.s32.totalorder %s380, %s381
      %p393 = scmp.eq.s32.totalorder %s36, 1
      %p394 = por %p392, %p393
      %p396 = scmp.ne.s32.totalorder %s381, %s395
      %p397 = scmp.eq.s32.totalorder %s36, 0
      %p398 = por %p396, %p397
      %s400 = sadd.s32 %s399, 1
      %p403 = scmp.eq.s32.totalorder %s30, 1
      %p404 = scmp.ne.s32.totalorder %s399, %s401
      %p405 = scmp.eq.s32.totalorder %s30, 0
      %p406 = por %p404, %p405
      %p407 = scmp.ne.s32.totalorder %s399, %s401
      %p408 = scmp.eq.s32.totalorder %s35, 1
      %p409 = por %p407, %p408
      %p410 = scmp.ne.s32.totalorder %s401, %s402
      %p411 = scmp.eq.s32.totalorder %s35, 0
      %p412 = por %p410, %p411
      %p413 = scmp.ne.s32.totalorder %s401, %s402
      %p414 = scmp.eq.s32.totalorder %s36, 1
      %p415 = por %p413, %p414
      %p417 = scmp.ne.s32.totalorder %s402, %s416
      %p418 = scmp.eq.s32.totalorder %s36, 0
      %p419 = por %p417, %p418
      %s421 = sadd.s32 %s420, 1
      %p424 = scmp.eq.s32.totalorder %s30, 1
      %p425 = scmp.ne.s32.totalorder %s420, %s422
      %p426 = scmp.eq.s32.totalorder %s30, 0
      %p427 = por %p425, %p426
      %p428 = scmp.ne.s32.totalorder %s420, %s422
      %p429 = scmp.eq.s32.totalorder %s35, 1
      %p430 = por %p428, %p429
      %p431 = scmp.ne.s32.totalorder %s422, %s423
      %p432 = scmp.eq.s32.totalorder %s35, 0
      %p433 = por %p431, %p432
      %p434 = scmp.ne.s32.totalorder %s422, %s423
      %p435 = scmp.eq.s32.totalorder %s36, 1
      %p436 = por %p434, %p435
      %p438 = scmp.ne.s32.totalorder %s423, %s437
      %p439 = scmp.eq.s32.totalorder %s36, 0
      %p440 = por %p438, %p439
      %s442 = sadd.s32 %s441, 1
      %p445 = scmp.eq.s32.totalorder %s30, 1
      %p446 = scmp.ne.s32.totalorder %s441, %s443
      %p447 = scmp.eq.s32.totalorder %s30, 0
      %p448 = por %p446, %p447
      %p449 = scmp.ne.s32.totalorder %s441, %s443
      %p450 = scmp.eq.s32.totalorder %s35, 1
      %p451 = por %p449, %p450
      %p452 = scmp.ne.s32.totalorder %s443, %s444
      %p453 = scmp.eq.s32.totalorder %s35, 0
      %p454 = por %p452, %p453
      %p455 = scmp.ne.s32.totalorder %s443, %s444
      %p456 = scmp.eq.s32.totalorder %s36, 1
      %p457 = por %p455, %p456
      %p459 = scmp.ne.s32.totalorder %s444, %s458
      %p460 = scmp.eq.s32.totalorder %s36, 0
      %p461 = por %p459, %p460
      %s463 = sadd.s32 %s462, 1
      %p466 = scmp.eq.s32.totalorder %s30, 1
      %p467 = scmp.ne.s32.totalorder %s462, %s464
      %p468 = scmp.eq.s32.totalorder %s30, 0
      %p469 = por %p467, %p468
      %p470 = scmp.ne.s32.totalorder %s462, %s464
      %p471 = scmp.eq.s32.totalorder %s35, 1
      %p472 = por %p470, %p471
      %p473 = scmp.ne.s32.totalorder %s464, %s465
      %p474 = scmp.eq.s32.totalorder %s35, 0
      %p475 = por %p473, %p474
      %p476 = scmp.ne.s32.totalorder %s464, %s465
      %p477 = scmp.eq.s32.totalorder %s36, 1
      %p478 = por %p476, %p477
      %p480 = scmp.ne.s32.totalorder %s465, %s479
      %p481 = scmp.eq.s32.totalorder %s36, 0
      %p482 = por %p480, %p481
      %s484 = sadd.s32 %s483, 1
      %p487 = scmp.eq.s32.totalorder %s30, 1
      %p488 = scmp.ne.s32.totalorder %s483, %s485
      %p489 = scmp.eq.s32.totalorder %s30, 0
      %p490 = por %p488, %p489
      %p491 = scmp.ne.s32.totalorder %s483, %s485
      %p492 = scmp.eq.s32.totalorder %s35, 1
      %p493 = por %p491, %p492
      %p494 = scmp.ne.s32.totalorder %s485, %s486
      %p495 = scmp.eq.s32.totalorder %s35, 0
      %p496 = por %p494, %p495
      %p497 = scmp.ne.s32.totalorder %s485, %s486
      %p498 = scmp.eq.s32.totalorder %s36, 1
      %p499 = por %p497, %p498
      %p501 = scmp.ne.s32.totalorder %s486, %s500
      %p502 = scmp.eq.s32.totalorder %s36, 0
      %p503 = por %p501, %p502
      %s504 = ssub.s32 %s30, %s37
      %p505 = scmp.eq.s32.totalorder %s504, 0
      %s507 = sadd.s32 %s506, 1
      %s508 = scalar_select %p505, %s506, %s507
      %p511 = pneg %p505
      %p512 = scmp.eq.s32.totalorder %s30, 1
      %p513 = por %p511, %p512
      %p514 = scmp.ne.s32.totalorder %s506, %s509
      %p515 = scmp.eq.s32.totalorder %s30, 0
      %p516 = por %p514, %p515
      %p517 = scmp.ne.s32.totalorder %s506, %s509
      %p518 = scmp.eq.s32.totalorder %s35, 1
      %p519 = por %p517, %p518
      %p520 = scmp.ne.s32.totalorder %s509, %s510
      %p521 = scmp.eq.s32.totalorder %s35, 0
      %p522 = por %p520, %p521
      %p523 = scmp.ne.s32.totalorder %s509, %s510
      %p524 = scmp.eq.s32.totalorder %s36, 1
      %p525 = por %p523, %p524
      %p527 = scmp.ne.s32.totalorder %s510, %s526
      %p528 = scmp.eq.s32.totalorder %s36, 0
      %p529 = por %p527, %p528
      %p530 = scmp.le.s32.totalorder 1, %s30
      %p531 = scmp.lt.s32.totalorder %s30, 3
      %p532 = pnand %p530, %p531
      %p533 = pneg %p532
      // Predicated region
      $region9: #{attention_with_learnable_embedding.1} parent=5 // pred_check
        _
      $region10: #{attention_with_learnable_embedding.1} parent=5 // pred_check_branch
        %535 = sbr.rel (%p532) target = $region12
      $region11: #{attention_with_learnable_embedding.1} parent=5 // pred_region
        %s536 = ssub.s32 %s30, 1
        // Predicated region
        $region13: #{attention_with_learnable_embedding.1} parent=11 // pred_check
          %p537 = pneg %p51
        $region14: #{attention_with_learnable_embedding.1} parent=11 // pred_check_branch
          %539 = sbr.rel (%p537) target = $region16
        $region15: #{attention_with_learnable_embedding.1} parent=11 // pred_region
          _
        $region16: #{attention_with_learnable_embedding.1} parent=11 // pred_fallthru
          _
        // Predicated region
        $region17: #{attention_with_learnable_embedding.1} parent=11 // pred_check
          %p540 = pneg %p72
        $region18: #{attention_with_learnable_embedding.1} parent=11 // pred_check_branch
          %542 = sbr.rel (%p540) target = $region20
        $region19: #{attention_with_learnable_embedding.1} parent=11 // pred_region
          _
        $region20: #{attention_with_learnable_embedding.1} parent=11 // pred_fallthru
          _
        // Predicated region
        $region21: #{attention_with_learnable_embedding.1} parent=11 // pred_check
          %p543 = pneg %p93
        $region22: #{attention_with_learnable_embedding.1} parent=11 // pred_check_branch
          %545 = sbr.rel (%p543) target = $region24
        $region23: #{attention_with_learnable_embedding.1} parent=11 // pred_region
          _
        $region24: #{attention_with_learnable_embedding.1} parent=11 // pred_fallthru
          _
        // Predicated region
        $region25: #{attention_with_learnable_embedding.1} parent=11 // pred_check
          %p546 = pneg %p244
        $region26: #{attention_with_learnable_embedding.1} parent=11 // pred_check_branch
          %548 = sbr.rel (%p546) target = $region28
        $region27: #{attention_with_learnable_embedding.1} parent=11 // pred_region
          _
        $region28: #{attention_with_learnable_embedding.1} parent=11 // pred_fallthru
          _
        // Predicated region
        $region29: #{attention_with_learnable_embedding.1} parent=11 // pred_check
          %p549 = pneg %p265
        $region30: #{attention_with_learnable_embedding.1} parent=11 // pred_check_branch
          %551 = sbr.rel (%p549) target = $region32
        $region31: #{attention_with_learnable_embedding.1} parent=11 // pred_region
          _
        $region32: #{attention_with_learnable_embedding.1} parent=11 // pred_fallthru
          _
        // Predicated region
        $region33: #{attention_with_learnable_embedding.1} parent=11 // pred_check
          %p552 = pneg %p286
        $region34: #{attention_with_learnable_embedding.1} parent=11 // pred_check_branch
          %554 = sbr.rel (%p552) target = $region36
        $region35: #{attention_with_learnable_embedding.1} parent=11 // pred_region
          _
        $region36: #{attention_with_learnable_embedding.1} parent=11 // pred_fallthru
          _
        // Predicated region
        $region37: #{attention_with_learnable_embedding.1} parent=11 // pred_check
          %p555 = pneg %p307
        $region38: #{attention_with_learnable_embedding.1} parent=11 // pred_check_branch
          %557 = sbr.rel (%p555) target = $region40
        $region39: #{attention_with_learnable_embedding.1} parent=11 // pred_region
          _
        $region40: #{attention_with_learnable_embedding.1} parent=11 // pred_fallthru
          _
        // Predicated region
        $region41: #{attention_with_learnable_embedding.1} parent=11 // pred_check
          %p558 = pneg %p328
        $region42: #{attention_with_learnable_embedding.1} parent=11 // pred_check_branch
          %560 = sbr.rel (%p558) target = $region44
        $region43: #{attention_with_learnable_embedding.1} parent=11 // pred_region
          _
        $region44: #{attention_with_learnable_embedding.1} parent=11 // pred_fallthru
          _
        // Predicated region
        $region45: #{attention_with_learnable_embedding.1} parent=11 // pred_check
          %p561 = pneg %p349
        $region46: #{attention_with_learnable_embedding.1} parent=11 // pred_check_branch
          %563 = sbr.rel (%p561) target = $region48
        $region47: #{attention_with_learnable_embedding.1} parent=11 // pred_region
          _
        $region48: #{attention_with_learnable_embedding.1} parent=11 // pred_fallthru
          _
        // Predicated region
        $region49: #{attention_with_learnable_embedding.1} parent=11 // pred_check
          %p564 = pneg %p370
        $region50: #{attention_with_learnable_embedding.1} parent=11 // pred_check_branch
          %566 = sbr.rel (%p564) target = $region52
        $region51: #{attention_with_learnable_embedding.1} parent=11 // pred_region
          _
        $region52: #{attention_with_learnable_embedding.1} parent=11 // pred_fallthru
          _
        // Predicated region
        $region53: #{attention_with_learnable_embedding.1} parent=11 // pred_check
          %p567 = pneg %p391
        $region54: #{attention_with_learnable_embedding.1} parent=11 // pred_check_branch
          %569 = sbr.rel (%p567) target = $region56
        $region55: #{attention_with_learnable_embedding.1} parent=11 // pred_region
          _
        $region56: #{attention_with_learnable_embedding.1} parent=11 // pred_fallthru
          _
        // Predicated region
        $region57: #{attention_with_learnable_embedding.1} parent=11 // pred_check
          %p570 = pneg %p412
        $region58: #{attention_with_learnable_embedding.1} parent=11 // pred_check_branch
          %572 = sbr.rel (%p570) target = $region60
        $region59: #{attention_with_learnable_embedding.1} parent=11 // pred_region
          _
        $region60: #{attention_with_learnable_embedding.1} parent=11 // pred_fallthru
          _
        // Predicated region
        $region61: #{attention_with_learnable_embedding.1} parent=11 // pred_check
          %p573 = pneg %p433
        $region62: #{attention_with_learnable_embedding.1} parent=11 // pred_check_branch
          %575 = sbr.rel (%p573) target = $region64
        $region63: #{attention_with_learnable_embedding.1} parent=11 // pred_region
          _
        $region64: #{attention_with_learnable_embedding.1} parent=11 // pred_fallthru
          _
        // Predicated region
        $region65: #{attention_with_learnable_embedding.1} parent=11 // pred_check
          %p576 = pneg %p454
        $region66: #{attention_with_learnable_embedding.1} parent=11 // pred_check_branch
          %578 = sbr.rel (%p576) target = $region68
        $region67: #{attention_with_learnable_embedding.1} parent=11 // pred_region
          _
        $region68: #{attention_with_learnable_embedding.1} parent=11 // pred_fallthru
          _
        // Predicated region
        $region69: #{attention_with_learnable_embedding.1} parent=11 // pred_check
          %p579 = pneg %p475
        $region70: #{attention_with_learnable_embedding.1} parent=11 // pred_check_branch
          %581 = sbr.rel (%p579) target = $region72
        $region71: #{attention_with_learnable_embedding.1} parent=11 // pred_region
          _
        $region72: #{attention_with_learnable_embedding.1} parent=11 // pred_fallthru
          _
        // Predicated region
        $region73: #{attention_with_learnable_embedding.1} parent=11 // pred_check
          %p582 = pneg %p496
        $region74: #{attention_with_learnable_embedding.1} parent=11 // pred_check_branch
          %584 = sbr.rel (%p582) target = $region76
        $region75: #{attention_with_learnable_embedding.1} parent=11 // pred_region
          _
        $region76: #{attention_with_learnable_embedding.1} parent=11 // pred_fallthru
          _
      $region12: #{attention_with_learnable_embedding.1} parent=5 // pred_fallthru
        _
      %p585 = scmp.lt.s32.totalorder %s30, 2
      // Predicated region
      $region77: #{attention_with_learnable_embedding.1} parent=5 // pred_check
        %p586 = pneg %p585
      $region78: #{attention_with_learnable_embedding.1} parent=5 // pred_check_branch
        %588 = sbr.rel (%p586) target = $region80
      $region79: #{attention_with_learnable_embedding.1} parent=5 // pred_region
        // Predicated region
        $region81: #{attention_with_learnable_embedding.1} parent=79 // pred_check
          %p589 = pneg %p113
        $region82: #{attention_with_learnable_embedding.1} parent=79 // pred_check_branch
          %591 = sbr.rel (%p589) target = $region84
        $region83: #{attention_with_learnable_embedding.1} parent=79 // pred_region
          %p592 = scmp.lt.s32.totalorder %s30, 1
          %s593 = scalar_select %p592, %s30, 1
          %s594 = smul.addr %s593, 8
          %s595 = scalar_lea.vmem %s3, %s594
        $region84: #{attention_with_learnable_embedding.1} parent=79 // pred_fallthru
          _
        // Predicated region
        $region85: #{attention_with_learnable_embedding.1} parent=79 // pred_check
          %p596 = pneg %p139
        $region86: #{attention_with_learnable_embedding.1} parent=79 // pred_check_branch
          %598 = sbr.rel (%p596) target = $region88
        $region87: #{attention_with_learnable_embedding.1} parent=79 // pred_region
          %p599 = scmp.lt.s32.totalorder %s30, 1
          %s600 = scalar_select %p599, %s30, 1
          %s601 = smul.addr %s600, 8
          %s602 = scalar_lea.vmem %s4, %s601
        $region88: #{attention_with_learnable_embedding.1} parent=79 // pred_fallthru
          _
        // Predicated region
        $region89: #{attention_with_learnable_embedding.1} parent=79 // pred_check
          %p603 = pneg %p165
        $region90: #{attention_with_learnable_embedding.1} parent=79 // pred_check_branch
          %605 = sbr.rel (%p603) target = $region92
        $region91: #{attention_with_learnable_embedding.1} parent=79 // pred_region
          %p606 = scmp.lt.s32.totalorder %s30, 1
          %s607 = scalar_select %p606, %s30, 1
          %s608 = smul.addr %s607, 8
          %s609 = scalar_lea.vmem %s5, %s608
        $region92: #{attention_with_learnable_embedding.1} parent=79 // pred_fallthru
          _
        // Predicated region
        $region93: #{attention_with_learnable_embedding.1} parent=79 // pred_check
          %p610 = pneg %p191
        $region94: #{attention_with_learnable_embedding.1} parent=79 // pred_check_branch
          %612 = sbr.rel (%p610) target = $region96
        $region95: #{attention_with_learnable_embedding.1} parent=79 // pred_region
          %p613 = scmp.lt.s32.totalorder %s30, 1
          %s614 = scalar_select %p613, %s30, 1
          %s615 = scalar_lea.vmem %s6, %s614
        $region96: #{attention_with_learnable_embedding.1} parent=79 // pred_fallthru
          _
        // Predicated region
        $region97: #{attention_with_learnable_embedding.1} parent=79 // pred_check
          %p616 = pneg %p217
        $region98: #{attention_with_learnable_embedding.1} parent=79 // pred_check_branch
          %618 = sbr.rel (%p616) target = $region100
        $region99: #{attention_with_learnable_embedding.1} parent=79 // pred_region
          %p619 = scmp.lt.s32.totalorder %s30, 1
          %s620 = scalar_select %p619, %s30, 1
          %s621 = scalar_lea.vmem %s7, %s620
        $region100: #{attention_with_learnable_embedding.1} parent=79 // pred_fallthru
          _
      $region80: #{attention_with_learnable_embedding.1} parent=5 // pred_fallthru
        _
      %p622 = scmp.le.s32.totalorder 1, %s30
      %p623 = scmp.lt.s32.totalorder %s30, 3
      %p624 = pnand %p622, %p623
      %p625 = pneg %p624
      // Predicated region
      $region101: #{attention_with_learnable_embedding.1} parent=5 // pred_check
        _
      $region102: #{attention_with_learnable_embedding.1} parent=5 // pred_check_branch
        %627 = sbr.rel (%p624) target = $region104
      $region103: #{attention_with_learnable_embedding.1} parent=5 // pred_region
        %s628 = ssub.s32 %s30, 1
        %p629 = pneg %p51
        %p630 = pneg %p48
        %p631 = pneg %p72
        %p632 = pneg %p69
        %p633 = pneg %p93
        %p634 = pneg %p90
        %p635 = scmp.lt.s32.totalorder %s35, 1
        %s636 = scalar_select %p635, %s35, 1
        %s637 = smul.addr %s636, 8
        %s638 = scalar_lea.vmem %s3, %s637
        %p639 = pneg %p119
        %p640 = pneg %p116
        %p641 = scmp.lt.s32.totalorder %s35, 1
        %s642 = scalar_select %p641, %s35, 1
        %s643 = smul.addr %s642, 8
        %s644 = scalar_lea.vmem %s4, %s643
        %p645 = pneg %p145
        %p646 = pneg %p142
        %p647 = scmp.lt.s32.totalorder %s35, 1
        %s648 = scalar_select %p647, %s35, 1
        %s649 = smul.addr %s648, 8
        %s650 = scalar_lea.vmem %s5, %s649
        %p651 = pneg %p171
        %p652 = pneg %p168
        %p653 = scmp.lt.s32.totalorder %s35, 1
        %s654 = scalar_select %p653, %s35, 1
        %s655 = scalar_lea.vmem %s6, %s654
        %p656 = pneg %p197
        %p657 = pneg %p194
        %p658 = scmp.lt.s32.totalorder %s35, 1
        %s659 = scalar_select %p658, %s35, 1
        %s660 = scalar_lea.vmem %s7, %s659
        %p661 = pneg %p223
        %p662 = pneg %p220
        %p663 = pneg %p244
        %p664 = pneg %p241
        %p665 = pneg %p265
        %p666 = pneg %p262
        %p667 = pneg %p286
        %p668 = pneg %p283
        %p669 = pneg %p307
        %p670 = pneg %p304
        %p671 = pneg %p328
        %p672 = pneg %p325
        %p673 = pneg %p349
        %p674 = pneg %p346
        %p675 = pneg %p370
        %p676 = pneg %p367
        %p677 = pneg %p391
        %p678 = pneg %p388
        %p679 = pneg %p412
        %p680 = pneg %p409
        %p681 = pneg %p433
        %p682 = pneg %p430
        %p683 = pneg %p454
        %p684 = pneg %p451
        %p685 = pneg %p475
        %p686 = pneg %p472
        %p687 = pneg %p496
        %p688 = pneg %p493
        %p689 = pneg %p522
        %p690 = pneg %p519
        %s691 = sand.u32 %s509, 1
        %s692 = scalar_lea.sflag [#allocation3], %s691
        %s693 = sand.u32 %s509, 1
        %s694 = scalar_lea.vmem [#allocation2], %s693
        %p695 = scmp.lt.s32.totalorder %s35, 1
        %s696 = scalar_select %p695, %s35, 1
        %s697 = smul.addr %s696, 8
        %s698 = scalar_lea.vmem %s3, %s697
        %p699 = scmp.lt.s32.totalorder %s35, 1
        %s700 = scalar_select %p699, %s35, 1
        %s701 = smul.addr %s700, 8
        %s702 = scalar_lea.vmem %s4, %s701
        %p703 = scmp.lt.s32.totalorder %s35, 1
        %s704 = scalar_select %p703, %s35, 1
        %s705 = smul.addr %s704, 8
        %s706 = scalar_lea.vmem %s5, %s705
        %p707 = scmp.lt.s32.totalorder %s35, 1
        %s708 = scalar_select %p707, %s35, 1
        %s709 = scalar_lea.vmem %s6, %s708
        %p710 = scmp.lt.s32.totalorder %s35, 1
        %s711 = scalar_select %p710, %s35, 1
        %s712 = scalar_lea.vmem %s7, %s711
        %v714 = vld [vmem:[%s0] sm:$0xff]
        %v715 = vld [vmem:[%s698] sm:$0xff]
        %v716 = vld [vmem:[%s1] sm:$0xff]
        %v717 = vld [vmem:[%s702] sm:$0xff]
        %v718 = vld [vmem:[%s2] sm:$0xff]
        %v719 = vld [vmem:[%s706] sm:$0xff]
        %v720 = vld [vmem:[%s712] sm:$0x1]
        %v721 = vsub.f32 %v720, 1.0
        %v722 = vmul.f32 %v721, 1e+30
        %v723 = vld [vmem:[%s709] sm:$0x1]
        %v724 = vsub.f32 %v723, 1.0
        %v725 = vmul.f32 %v724, 1e+30
        %v726 = vpack.c.bf16 %v715, %v714
        %v727 = vld [vmem:[%s8] sm:$0xf]
        %v728 = vld [vmem:[%s8 + $0x4] sm:$0xf]
        %v729 = vld [vmem:[%s8 + $0x8] sm:$0xf]
        %v730 = vld [vmem:[%s8 + $0xc] sm:$0xf]
        %v731 = vld [vmem:[%s9] sm:$0x1]
        %v733 = vlaneseq
        %v734 = vshrl.u32 %v733, 7
        %v735 = vsub.s32 0, %v734
        %v736 = vrot.slane %v731, %v735
        %v742 = vunpack.c.l.b16 %v727
        %v743 = vunpack.c.l.b16 %v728
        %v744 = vunpack.c.l.b16 %v729
        %v745 = vunpack.c.l.b16 %v730
        %v746 = vpack.c.b16 %v743, %v742
        %v747 = vpack.c.b16 %v745, %v744
        %vm750 = vcmask 261120
        %v752 = vsel %vm750, %v726, 0
        %754 = vmatprep.subr.bf16.mxu0 0
        %755 = vmatpush1.bf16.msra.mxu0 %v746
        %756 = vmatprep.subr.bf16.mxu0 0
        %757 = vmatpush1.bf16.msra.mxu0 %v747
        %758 = vmatprep.subr.bf16.mxu0 0
        %759 = vmatpush1.bf16.msra.mxu0 0
        %760 = vmatprep.subr.bf16.mxu0 0
        %761 = vmatpush1.bf16.msra.mxu0 0
        %762 = vmatprep.subr.bf16.mxu0 0
        %763 = vmatpush1.bf16.msra.mxu0 0
        %764 = vmatprep.subr.bf16.mxu0 0
        %765 = vmatpush1.bf16.msra.mxu0 0
        %766 = vmatprep.subr.bf16.mxu0 0
        %767 = vmatpush1.bf16.msra.mxu0 0
        %768 = vmatprep.subr.bf16.mxu0 0
        %769 = vmatpush1.bf16.msra.mxu0 0
        %770 = vmatprep.subr.bf16.mxu0 0
        %771 = vmatpush1.bf16.msra.mxu0 0
        %772 = vmatprep.subr.bf16.mxu0 0
        %773 = vmatpush1.bf16.msra.mxu0 0
        %774 = vmatprep.subr.bf16.mxu0 0
        %775 = vmatpush1.bf16.msra.mxu0 0
        %776 = vmatprep.subr.bf16.mxu0 0
        %777 = vmatpush1.bf16.msra.mxu0 0
        %778 = vmatprep.subr.bf16.mxu0 0
        %779 = vmatpush1.bf16.msra.mxu0 0
        %780 = vmatprep.subr.bf16.mxu0 0
        %781 = vmatpush1.bf16.msra.mxu0 0
        %782 = vmatprep.subr.bf16.mxu0 0
        %783 = vmatpush1.bf16.msra.mxu0 0
        %784 = vmatprep.subr.bf16.mxu0 0
        %785 = vmatpush1.bf16.msra.mxu0 0
        %786 = vmatprep.mubr.bf16.mxu0 0
        %787 = vmatmul.mubr.bf16.gmra.mrb[0].mxu0 %v752
        %v788 = vpop.f32.mrb[0].mxu0
        %v789 = vadd.f32 %v736, %v788
        %v790 = vpop.f32.mrb[0].mxu0
        %v791 = vpop.f32.mrb[0].mxu0
        %v792 = vadd.f32 %v736, %v791
        %v793 = vpop.f32.mrb[0].mxu0
        %794 = vdwg.mxu0
        %v795 = vpack.c.bf16 %v717, %v716
        %v796 = vld [vmem:[%s10] sm:$0xf]
        %v797 = vld [vmem:[%s10 + $0x4] sm:$0xf]
        %v798 = vld [vmem:[%s10 + $0x8] sm:$0xf]
        %v799 = vld [vmem:[%s10 + $0xc] sm:$0xf]
        %v800 = vld [vmem:[%s11] sm:$0x1]
        %v802 = vlaneseq
        %v803 = vshrl.u32 %v802, 7
        %v804 = vsub.s32 0, %v803
        %v805 = vrot.slane %v800, %v804
        %v811 = vunpack.c.l.b16 %v796
        %v812 = vunpack.c.l.b16 %v797
        %v813 = vunpack.c.l.b16 %v798
        %v814 = vunpack.c.l.b16 %v799
        %v815 = vpack.c.b16 %v812, %v811
        %v816 = vpack.c.b16 %v814, %v813
        %v820 = vsel %vm750, %v795, 0
        %822 = vmatprep.subr.bf16.mxu0 0
        %823 = vmatpush1.bf16.msra.mxu0 %v815
        %824 = vmatprep.subr.bf16.mxu0 0
        %825 = vmatpush1.bf16.msra.mxu0 %v816
        %826 = vmatprep.subr.bf16.mxu0 0
        %827 = vmatpush1.bf16.msra.mxu0 0
        %828 = vmatprep.subr.bf16.mxu0 0
        %829 = vmatpush1.bf16.msra.mxu0 0
        %830 = vmatprep.subr.bf16.mxu0 0
        %831 = vmatpush1.bf16.msra.mxu0 0
        %832 = vmatprep.subr.bf16.mxu0 0
        %833 = vmatpush1.bf16.msra.mxu0 0
        %834 = vmatprep.subr.bf16.mxu0 0
        %835 = vmatpush1.bf16.msra.mxu0 0
        %836 = vmatprep.subr.bf16.mxu0 0
        %837 = vmatpush1.bf16.msra.mxu0 0
        %838 = vmatprep.subr.bf16.mxu0 0
        %839 = vmatpush1.bf16.msra.mxu0 0
        %840 = vmatprep.subr.bf16.mxu0 0
        %841 = vmatpush1.bf16.msra.mxu0 0
        %842 = vmatprep.subr.bf16.mxu0 0
        %843 = vmatpush1.bf16.msra.mxu0 0
        %844 = vmatprep.subr.bf16.mxu0 0
        %845 = vmatpush1.bf16.msra.mxu0 0
        %846 = vmatprep.subr.bf16.mxu0 0
        %847 = vmatpush1.bf16.msra.mxu0 0
        %848 = vmatprep.subr.bf16.mxu0 0
        %849 = vmatpush1.bf16.msra.mxu0 0
        %850 = vmatprep.subr.bf16.mxu0 0
        %851 = vmatpush1.bf16.msra.mxu0 0
        %852 = vmatprep.subr.bf16.mxu0 0
        %853 = vmatpush1.bf16.msra.mxu0 0
        %854 = vmatprep.mubr.bf16.mxu0 0
        %855 = vmatmul.mubr.bf16.gmra.mrb[0].mxu0 %v820
        %v856 = vpop.f32.mrb[0].mxu0
        %v857 = vadd.f32 %v805, %v856
        %v858 = vpop.f32.mrb[0].mxu0
        %v859 = vpop.f32.mrb[0].mxu0
        %v860 = vadd.f32 %v805, %v859
        %v861 = vpop.f32.mrb[0].mxu0
        %862 = vdwg.mxu0
        %v863 = vpack.c.bf16 %v719, %v718
        %v864 = vld [vmem:[%s12] sm:$0xf]
        %v865 = vld [vmem:[%s12 + $0x4] sm:$0xf]
        %v866 = vld [vmem:[%s13] sm:$0x1]
        %v868 = vlaneseq
        %v869 = vshrl.u32 %v868, 7
        %v870 = vsub.s32 0, %v869
        %v871 = vrot.slane %v866, %v870
        %v875 = vunpack.c.l.b16 %v864
        %v876 = vunpack.c.l.b16 %v865
        %v877 = vpack.c.b16 %v876, %v875
        %vm879 = vcmask 130048
        %v881 = vsel %vm879, %v863, 0
        %883 = vmatprep.subr.bf16.mxu0 0
        %884 = vmatpush1.bf16.msra.mxu0 %v877
        %885 = vmatprep.subr.bf16.mxu0 0
        %886 = vmatpush1.bf16.msra.mxu0 0
        %887 = vmatprep.subr.bf16.mxu0 0
        %888 = vmatpush1.bf16.msra.mxu0 0
        %889 = vmatprep.subr.bf16.mxu0 0
        %890 = vmatpush1.bf16.msra.mxu0 0
        %891 = vmatprep.subr.bf16.mxu0 0
        %892 = vmatpush1.bf16.msra.mxu0 0
        %893 = vmatprep.subr.bf16.mxu0 0
        %894 = vmatpush1.bf16.msra.mxu0 0
        %895 = vmatprep.subr.bf16.mxu0 0
        %896 = vmatpush1.bf16.msra.mxu0 0
        %897 = vmatprep.subr.bf16.mxu0 0
        %898 = vmatpush1.bf16.msra.mxu0 0
        %899 = vmatprep.subr.bf16.mxu0 0
        %900 = vmatpush1.bf16.msra.mxu0 0
        %901 = vmatprep.subr.bf16.mxu0 0
        %902 = vmatpush1.bf16.msra.mxu0 0
        %903 = vmatprep.subr.bf16.mxu0 0
        %904 = vmatpush1.bf16.msra.mxu0 0
        %905 = vmatprep.subr.bf16.mxu0 0
        %906 = vmatpush1.bf16.msra.mxu0 0
        %907 = vmatprep.subr.bf16.mxu0 0
        %908 = vmatpush1.bf16.msra.mxu0 0
        %909 = vmatprep.subr.bf16.mxu0 0
        %910 = vmatpush1.bf16.msra.mxu0 0
        %911 = vmatprep.subr.bf16.mxu0 0
        %912 = vmatpush1.bf16.msra.mxu0 0
        %913 = vmatprep.subr.bf16.mxu0 0
        %914 = vmatpush1.bf16.msra.mxu0 0
        %915 = vmatprep.mubr.bf16.mxu0 0
        %916 = vmatmul.mubr.bf16.gmra.mrb[0].mxu0 %v881
        %v917 = vpop.f32.mrb[0].mxu0
        %v918 = vadd.f32 %v871, %v917
        %v919 = vpop.f32.mrb[0].mxu0
        %v920 = vpop.f32.mrb[0].mxu0
        %v921 = vadd.f32 %v871, %v920
        %v922 = vpop.f32.mrb[0].mxu0
        %923 = vdwg.mxu0
        %v924 = vpack.c.bf16 %v792, %v789
        %v925 = vpack.c.bf16 %v860, %v857
        %v926 = vpack.c.bf16 %v921, %v918
        %v928 = vlaneseq
        %v929 = vshrl.u32 %v928, 7
        %v930 = vsub.s32 0, %v929
        %v931 = vrot.slane %v722, %v930
        %vm933 = vcmask 64512
        %v935 = vsel %vm933, %v924, 0
        %v938 = vsel %vm933, %v925, 0
        %940 = vmatprep.subr.bf16.mxu0 0
        %941 = vmatpush1.bf16.xpose.msra.mxu0 %v938
        %942 = vmatprep.subr.bf16.mxu0 0
        %943 = vmatpush1.bf16.xpose.msra.mxu0 0
        %944 = vmatprep.subr.bf16.mxu0 0
        %945 = vmatpush1.bf16.xpose.msra.mxu0 0
        %946 = vmatprep.subr.bf16.mxu0 0
        %947 = vmatpush1.bf16.xpose.msra.mxu0 0
        %948 = vmatprep.subr.bf16.mxu0 0
        %949 = vmatpush1.bf16.xpose.msra.mxu0 0
        %950 = vmatprep.subr.bf16.mxu0 0
        %951 = vmatpush1.bf16.xpose.msra.mxu0 0
        %952 = vmatprep.subr.bf16.mxu0 0
        %953 = vmatpush1.bf16.xpose.msra.mxu0 0
        %954 = vmatprep.subr.bf16.mxu0 0
        %955 = vmatpush1.bf16.xpose.msra.mxu0 0
        %956 = vmatprep.subr.bf16.mxu0 0
        %957 = vmatpush1.bf16.xpose.msra.mxu0 0
        %958 = vmatprep.subr.bf16.mxu0 0
        %959 = vmatpush1.bf16.xpose.msra.mxu0 0
        %960 = vmatprep.subr.bf16.mxu0 0
        %961 = vmatpush1.bf16.xpose.msra.mxu0 0
        %962 = vmatprep.subr.bf16.mxu0 0
        %963 = vmatpush1.bf16.xpose.msra.mxu0 0
        %964 = vmatprep.subr.bf16.mxu0 0
        %965 = vmatpush1.bf16.xpose.msra.mxu0 0
        %966 = vmatprep.subr.bf16.mxu0 0
        %967 = vmatpush1.bf16.xpose.msra.mxu0 0
        %968 = vmatprep.subr.bf16.mxu0 0
        %969 = vmatpush1.bf16.xpose.msra.mxu0 0
        %970 = vmatprep.subr.bf16.mxu0 0
        %971 = vmatpush1.bf16.xpose.msra.mxu0 0
        %972 = vmatprep.mubr.bf16.mxu0 0
        %973 = vmatmul.mubr.bf16.gmra.mrb[0].mxu0 %v935
        %v974 = vpop.f32.mrb[0].mxu0
        %v975 = vadd.f32 %v931, %v974
        %v976 = vpop.f32.mrb[0].mxu0
        %v977 = vpop.f32.mrb[0].mxu0
        %v978 = vadd.f32 %v931, %v977
        %v979 = vpop.f32.mrb[0].mxu0
        %980 = vdwg.mxu0
        %v981 = vsel %vm879, %v975, -inf
        %982 = vmax.xlane.f32.xlu0 %v981
        %v983 = vpop.xlane.xlu0 %982
        %v984 = vsel %vm879, %v978, -inf
        %985 = vmax.xlane.f32.xlu0 %v984
        %v986 = vpop.xlane.xlu0 %985
        %v987 = vsub.f32 %v975, %v983
        %v988 = vsub.f32 %v978, %v986
        %v989 = vmul.f32 %v987, 1.442695
        %v990 = vpow.pop %v989
        %v991 = vmul.f32 %v988, 1.442695
        %v992 = vpow.pop %v991
        %v993 = vsel %vm879, %v990, 0.0
        %994 = vadd.xlane.f32.xlu0 %v993
        %v995 = vpop.xlane.xlu0 %994
        %v996 = vsel %vm879, %v992, 0.0
        %997 = vadd.xlane.f32.xlu0 %v996
        %v998 = vpop.xlane.xlu0 %997
        %v999 = vpack.c.bf16 %v992, %v990
        %v1001 = vsel %vm879, %v999, 0
        %1003 = vmatprep.subr.bf16.mxu0 0
        %1004 = vmatpush1.bf16.msra.mxu0 %v926
        %1005 = vmatprep.subr.bf16.mxu0 0
        %1006 = vmatpush1.bf16.msra.mxu0 0
        %1007 = vmatprep.subr.bf16.mxu0 0
        %1008 = vmatpush1.bf16.msra.mxu0 0
        %1009 = vmatprep.subr.bf16.mxu0 0
        %1010 = vmatpush1.bf16.msra.mxu0 0
        %1011 = vmatprep.subr.bf16.mxu0 0
        %1012 = vmatpush1.bf16.msra.mxu0 0
        %1013 = vmatprep.subr.bf16.mxu0 0
        %1014 = vmatpush1.bf16.msra.mxu0 0
        %1015 = vmatprep.subr.bf16.mxu0 0
        %1016 = vmatpush1.bf16.msra.mxu0 0
        %1017 = vmatprep.subr.bf16.mxu0 0
        %1018 = vmatpush1.bf16.msra.mxu0 0
        %1019 = vmatprep.subr.bf16.mxu0 0
        %1020 = vmatpush1.bf16.msra.mxu0 0
        %1021 = vmatprep.subr.bf16.mxu0 0
        %1022 = vmatpush1.bf16.msra.mxu0 0
        %1023 = vmatprep.subr.bf16.mxu0 0
        %1024 = vmatpush1.bf16.msra.mxu0 0
        %1025 = vmatprep.subr.bf16.mxu0 0
        %1026 = vmatpush1.bf16.msra.mxu0 0
        %1027 = vmatprep.subr.bf16.mxu0 0
        %1028 = vmatpush1.bf16.msra.mxu0 0
        %1029 = vmatprep.subr.bf16.mxu0 0
        %1030 = vmatpush1.bf16.msra.mxu0 0
        %1031 = vmatprep.subr.bf16.mxu0 0
        %1032 = vmatpush1.bf16.msra.mxu0 0
        %1033 = vmatprep.subr.bf16.mxu0 0
        %1034 = vmatpush1.bf16.msra.mxu0 0
        %1035 = vmatprep.mubr.bf16.mxu0 0
        %1036 = vmatmul.mubr.bf16.gmra.mrb[0].mxu0 %v1001
        %v1037 = vpop.f32.mrb[0].mxu0
        %v1038 = vadd.f32 0.0, %v1037
        %v1039 = vpop.f32.mrb[0].mxu0
        %v1040 = vpop.f32.mrb[0].mxu0
        %v1041 = vadd.f32 0.0, %v1040
        %v1042 = vpop.f32.mrb[0].mxu0
        %1043 = vdwg.mxu0
        %v1044 = vrcp.pop %v995
        %v1045 = vrcp.pop %v998
        %v1046 = vmul.f32 %v1038, %v1044
        %v1047 = vmul.f32 %v1041, %v1045
        %1049 = vrot.lane.b32.xlu0 %v924, 120
        %v1050 = vpop.permute.xlu0 %1049
        %1052 = vrot.lane.b32.xlu0 %v925, 120
        %v1053 = vpop.permute.xlu0 %1052
        %v1055 = vsel %vm933, %v1050, 0
        %v1058 = vsel %vm933, %v1053, 0
        %1060 = vmatprep.subr.bf16.mxu0 0
        %1061 = vmatpush1.bf16.xpose.msra.mxu0 %v1058
        %1062 = vmatprep.subr.bf16.mxu0 0
        %1063 = vmatpush1.bf16.xpose.msra.mxu0 0
        %1064 = vmatprep.subr.bf16.mxu0 0
        %1065 = vmatpush1.bf16.xpose.msra.mxu0 0
        %1066 = vmatprep.subr.bf16.mxu0 0
        %1067 = vmatpush1.bf16.xpose.msra.mxu0 0
        %1068 = vmatprep.subr.bf16.mxu0 0
        %1069 = vmatpush1.bf16.xpose.msra.mxu0 0
        %1070 = vmatprep.subr.bf16.mxu0 0
        %1071 = vmatpush1.bf16.xpose.msra.mxu0 0
        %1072 = vmatprep.subr.bf16.mxu0 0
        %1073 = vmatpush1.bf16.xpose.msra.mxu0 0
        %1074 = vmatprep.subr.bf16.mxu0 0
        %1075 = vmatpush1.bf16.xpose.msra.mxu0 0
        %1076 = vmatprep.subr.bf16.mxu0 0
        %1077 = vmatpush1.bf16.xpose.msra.mxu0 0
        %1078 = vmatprep.subr.bf16.mxu0 0
        %1079 = vmatpush1.bf16.xpose.msra.mxu0 0
        %1080 = vmatprep.subr.bf16.mxu0 0
        %1081 = vmatpush1.bf16.xpose.msra.mxu0 0
        %1082 = vmatprep.subr.bf16.mxu0 0
        %1083 = vmatpush1.bf16.xpose.msra.mxu0 0
        %1084 = vmatprep.subr.bf16.mxu0 0
        %1085 = vmatpush1.bf16.xpose.msra.mxu0 0
        %1086 = vmatprep.subr.bf16.mxu0 0
        %1087 = vmatpush1.bf16.xpose.msra.mxu0 0
        %1088 = vmatprep.subr.bf16.mxu0 0
        %1089 = vmatpush1.bf16.xpose.msra.mxu0 0
        %1090 = vmatprep.subr.bf16.mxu0 0
        %1091 = vmatpush1.bf16.xpose.msra.mxu0 0
        %1092 = vmatprep.mubr.bf16.mxu0 0
        %1093 = vmatmul.mubr.bf16.gmra.mrb[0].mxu0 %v1055
        %v1094 = vpop.f32.mrb[0].mxu0
        %v1095 = vadd.f32 %v931, %v1094
        %v1096 = vpop.f32.mrb[0].mxu0
        %v1097 = vpop.f32.mrb[0].mxu0
        %v1098 = vadd.f32 %v931, %v1097
        %v1099 = vpop.f32.mrb[0].mxu0
        %1100 = vdwg.mxu0
        %v1101 = vsel %vm879, %v1095, -inf
        %1102 = vmax.xlane.f32.xlu0 %v1101
        %v1103 = vpop.xlane.xlu0 %1102
        %v1104 = vsel %vm879, %v1098, -inf
        %1105 = vmax.xlane.f32.xlu0 %v1104
        %v1106 = vpop.xlane.xlu0 %1105
        %v1107 = vsub.f32 %v1095, %v1103
        %v1108 = vsub.f32 %v1098, %v1106
        %v1109 = vmul.f32 %v1107, 1.442695
        %v1110 = vpow.pop %v1109
        %v1111 = vmul.f32 %v1108, 1.442695
        %v1112 = vpow.pop %v1111
        %v1113 = vsel %vm879, %v1110, 0.0
        %1114 = vadd.xlane.f32.xlu0 %v1113
        %v1115 = vpop.xlane.xlu0 %1114
        %v1116 = vsel %vm879, %v1112, 0.0
        %1117 = vadd.xlane.f32.xlu0 %v1116
        %v1118 = vpop.xlane.xlu0 %1117
        %v1119 = vpack.c.bf16 %v1112, %v1110
        %1121 = vrot.lane.b32.xlu0 %v926, 120
        %v1122 = vpop.permute.xlu0 %1121
        %v1125 = vsel %vm879, %v1119, 0
        %1127 = vmatprep.subr.bf16.mxu0 0
        %1128 = vmatpush1.bf16.msra.mxu0 %v1122
        %1129 = vmatprep.subr.bf16.mxu0 0
        %1130 = vmatpush1.bf16.msra.mxu0 0
        %1131 = vmatprep.subr.bf16.mxu0 0
        %1132 = vmatpush1.bf16.msra.mxu0 0
        %1133 = vmatprep.subr.bf16.mxu0 0
        %1134 = vmatpush1.bf16.msra.mxu0 0
        %1135 = vmatprep.subr.bf16.mxu0 0
        %1136 = vmatpush1.bf16.msra.mxu0 0
        %1137 = vmatprep.subr.bf16.mxu0 0
        %1138 = vmatpush1.bf16.msra.mxu0 0
        %1139 = vmatprep.subr.bf16.mxu0 0
        %1140 = vmatpush1.bf16.msra.mxu0 0
        %1141 = vmatprep.subr.bf16.mxu0 0
        %1142 = vmatpush1.bf16.msra.mxu0 0
        %1143 = vmatprep.subr.bf16.mxu0 0
        %1144 = vmatpush1.bf16.msra.mxu0 0
        %1145 = vmatprep.subr.bf16.mxu0 0
        %1146 = vmatpush1.bf16.msra.mxu0 0
        %1147 = vmatprep.subr.bf16.mxu0 0
        %1148 = vmatpush1.bf16.msra.mxu0 0
        %1149 = vmatprep.subr.bf16.mxu0 0
        %1150 = vmatpush1.bf16.msra.mxu0 0
        %1151 = vmatprep.subr.bf16.mxu0 0
        %1152 = vmatpush1.bf16.msra.mxu0 0
        %1153 = vmatprep.subr.bf16.mxu0 0
        %1154 = vmatpush1.bf16.msra.mxu0 0
        %1155 = vmatprep.subr.bf16.mxu0 0
        %1156 = vmatpush1.bf16.msra.mxu0 0
        %1157 = vmatprep.subr.bf16.mxu0 0
        %1158 = vmatpush1.bf16.msra.mxu0 0
        %1159 = vmatprep.mubr.bf16.mxu0 0
        %1160 = vmatmul.mubr.bf16.gmra.mrb[0].mxu0 %v1125
        %v1161 = vpop.f32.mrb[0].mxu0
        %v1162 = vadd.f32 0.0, %v1161
        %v1163 = vpop.f32.mrb[0].mxu0
        %v1164 = vpop.f32.mrb[0].mxu0
        %v1165 = vadd.f32 0.0, %v1164
        %v1166 = vpop.f32.mrb[0].mxu0
        %1167 = vdwg.mxu0
        %v1168 = vrcp.pop %v1115
        %v1169 = vrcp.pop %v1118
        %v1170 = vmul.f32 %v1162, %v1168
        %v1171 = vmul.f32 %v1165, %v1169
        %1172 = vrot.lane.b32.xlu0 %v924, 112
        %v1173 = vpop.permute.xlu0 %1172
        %1174 = vrot.lane.b32.xlu0 %v925, 112
        %v1175 = vpop.permute.xlu0 %1174
        %v1177 = vsel %vm933, %v1173, 0
        %v1180 = vsel %vm933, %v1175, 0
        %1182 = vmatprep.subr.bf16.mxu0 0
        %1183 = vmatpush1.bf16.xpose.msra.mxu0 %v1180
        %1184 = vmatprep.subr.bf16.mxu0 0
        %1185 = vmatpush1.bf16.xpose.msra.mxu0 0
        %1186 = vmatprep.subr.bf16.mxu0 0
        %1187 = vmatpush1.bf16.xpose.msra.mxu0 0
        %1188 = vmatprep.subr.bf16.mxu0 0
        %1189 = vmatpush1.bf16.xpose.msra.mxu0 0
        %1190 = vmatprep.subr.bf16.mxu0 0
        %1191 = vmatpush1.bf16.xpose.msra.mxu0 0
        %1192 = vmatprep.subr.bf16.mxu0 0
        %1193 = vmatpush1.bf16.xpose.msra.mxu0 0
        %1194 = vmatprep.subr.bf16.mxu0 0
        %1195 = vmatpush1.bf16.xpose.msra.mxu0 0
        %1196 = vmatprep.subr.bf16.mxu0 0
        %1197 = vmatpush1.bf16.xpose.msra.mxu0 0
        %1198 = vmatprep.subr.bf16.mxu0 0
        %1199 = vmatpush1.bf16.xpose.msra.mxu0 0
        %1200 = vmatprep.subr.bf16.mxu0 0
        %1201 = vmatpush1.bf16.xpose.msra.mxu0 0
        %1202 = vmatprep.subr.bf16.mxu0 0
        %1203 = vmatpush1.bf16.xpose.msra.mxu0 0
        %1204 = vmatprep.subr.bf16.mxu0 0
        %1205 = vmatpush1.bf16.xpose.msra.mxu0 0
        %1206 = vmatprep.subr.bf16.mxu0 0
        %1207 = vmatpush1.bf16.xpose.msra.mxu0 0
        %1208 = vmatprep.subr.bf16.mxu0 0
        %1209 = vmatpush1.bf16.xpose.msra.mxu0 0
        %1210 = vmatprep.subr.bf16.mxu0 0
        %1211 = vmatpush1.bf16.xpose.msra.mxu0 0
        %1212 = vmatprep.subr.bf16.mxu0 0
        %1213 = vmatpush1.bf16.xpose.msra.mxu0 0
        %1214 = vmatprep.mubr.bf16.mxu0 0
        %1215 = vmatmul.mubr.bf16.gmra.mrb[0].mxu0 %v1177
        %v1216 = vpop.f32.mrb[0].mxu0
        %v1217 = vadd.f32 %v931, %v1216
        %v1218 = vpop.f32.mrb[0].mxu0
        %v1219 = vpop.f32.mrb[0].mxu0
        %v1220 = vadd.f32 %v931, %v1219
        %v1221 = vpop.f32.mrb[0].mxu0
        %1222 = vdwg.mxu0
        %v1223 = vsel %vm879, %v1217, -inf
        %1224 = vmax.xlane.f32.xlu0 %v1223
        %v1225 = vpop.xlane.xlu0 %1224
        %v1226 = vsel %vm879, %v1220, -inf
        %1227 = vmax.xlane.f32.xlu0 %v1226
        %v1228 = vpop.xlane.xlu0 %1227
        %v1229 = vsub.f32 %v1217, %v1225
        %v1230 = vsub.f32 %v1220, %v1228
        %v1231 = vmul.f32 %v1229, 1.442695
        %v1232 = vpow.pop %v1231
        %v1233 = vmul.f32 %v1230, 1.442695
        %v1234 = vpow.pop %v1233
        %v1235 = vsel %vm879, %v1232, 0.0
        %1236 = vadd.xlane.f32.xlu0 %v1235
        %v1237 = vpop.xlane.xlu0 %1236
        %v1238 = vsel %vm879, %v1234, 0.0
        %1239 = vadd.xlane.f32.xlu0 %v1238
        %v1240 = vpop.xlane.xlu0 %1239
        %v1241 = vpack.c.bf16 %v1234, %v1232
        %1242 = vrot.lane.b32.xlu0 %v926, 112
        %v1243 = vpop.permute.xlu0 %1242
        %v1246 = vsel %vm879, %v1241, 0
        %1248 = vmatprep.subr.bf16.mxu0 0
        %1249 = vmatpush1.bf16.msra.mxu0 %v1243
        %1250 = vmatprep.subr.bf16.mxu0 0
        %1251 = vmatpush1.bf16.msra.mxu0 0
        %1252 = vmatprep.subr.bf16.mxu0 0
        %1253 = vmatpush1.bf16.msra.mxu0 0
        %1254 = vmatprep.subr.bf16.mxu0 0
        %1255 = vmatpush1.bf16.msra.mxu0 0
        %1256 = vmatprep.subr.bf16.mxu0 0
        %1257 = vmatpush1.bf16.msra.mxu0 0
        %1258 = vmatprep.subr.bf16.mxu0 0
        %1259 = vmatpush1.bf16.msra.mxu0 0
        %1260 = vmatprep.subr.bf16.mxu0 0
        %1261 = vmatpush1.bf16.msra.mxu0 0
        %1262 = vmatprep.subr.bf16.mxu0 0
        %1263 = vmatpush1.bf16.msra.mxu0 0
        %1264 = vmatprep.subr.bf16.mxu0 0
        %1265 = vmatpush1.bf16.msra.mxu0 0
        %1266 = vmatprep.subr.bf16.mxu0 0
        %1267 = vmatpush1.bf16.msra.mxu0 0
        %1268 = vmatprep.subr.bf16.mxu0 0
        %1269 = vmatpush1.bf16.msra.mxu0 0
        %1270 = vmatprep.subr.bf16.mxu0 0
        %1271 = vmatpush1.bf16.msra.mxu0 0
        %1272 = vmatprep.subr.bf16.mxu0 0
        %1273 = vmatpush1.bf16.msra.mxu0 0
        %1274 = vmatprep.subr.bf16.mxu0 0
        %1275 = vmatpush1.bf16.msra.mxu0 0
        %1276 = vmatprep.subr.bf16.mxu0 0
        %1277 = vmatpush1.bf16.msra.mxu0 0
        %1278 = vmatprep.subr.bf16.mxu0 0
        %1279 = vmatpush1.bf16.msra.mxu0 0
        %1280 = vmatprep.mubr.bf16.mxu0 0
        %1281 = vmatmul.mubr.bf16.gmra.mrb[0].mxu0 %v1246
        %v1282 = vpop.f32.mrb[0].mxu0
        %v1283 = vadd.f32 0.0, %v1282
        %v1284 = vpop.f32.mrb[0].mxu0
        %v1285 = vpop.f32.mrb[0].mxu0
        %v1286 = vadd.f32 0.0, %v1285
        %v1287 = vpop.f32.mrb[0].mxu0
        %1288 = vdwg.mxu0
        %v1289 = vrcp.pop %v1237
        %v1290 = vrcp.pop %v1240
        %v1291 = vmul.f32 %v1283, %v1289
        %v1292 = vmul.f32 %v1286, %v1290
        %1293 = vrot.lane.b32.xlu0 %v924, 104
        %v1294 = vpop.permute.xlu0 %1293
        %1295 = vrot.lane.b32.xlu0 %v925, 104
        %v1296 = vpop.permute.xlu0 %1295
        %v1298 = vsel %vm933, %v1294, 0
        %v1301 = vsel %vm933, %v1296, 0
        %1303 = vmatprep.subr.bf16.mxu0 0
        %1304 = vmatpush1.bf16.xpose.msra.mxu0 %v1301
        %1305 = vmatprep.subr.bf16.mxu0 0
        %1306 = vmatpush1.bf16.xpose.msra.mxu0 0
        %1307 = vmatprep.subr.bf16.mxu0 0
        %1308 = vmatpush1.bf16.xpose.msra.mxu0 0
        %1309 = vmatprep.subr.bf16.mxu0 0
        %1310 = vmatpush1.bf16.xpose.msra.mxu0 0
        %1311 = vmatprep.subr.bf16.mxu0 0
        %1312 = vmatpush1.bf16.xpose.msra.mxu0 0
        %1313 = vmatprep.subr.bf16.mxu0 0
        %1314 = vmatpush1.bf16.xpose.msra.mxu0 0
        %1315 = vmatprep.subr.bf16.mxu0 0
        %1316 = vmatpush1.bf16.xpose.msra.mxu0 0
        %1317 = vmatprep.subr.bf16.mxu0 0
        %1318 = vmatpush1.bf16.xpose.msra.mxu0 0
        %1319 = vmatprep.subr.bf16.mxu0 0
        %1320 = vmatpush1.bf16.xpose.msra.mxu0 0
        %1321 = vmatprep.subr.bf16.mxu0 0
        %1322 = vmatpush1.bf16.xpose.msra.mxu0 0
        %1323 = vmatprep.subr.bf16.mxu0 0
        %1324 = vmatpush1.bf16.xpose.msra.mxu0 0
        %1325 = vmatprep.subr.bf16.mxu0 0
        %1326 = vmatpush1.bf16.xpose.msra.mxu0 0
        %1327 = vmatprep.subr.bf16.mxu0 0
        %1328 = vmatpush1.bf16.xpose.msra.mxu0 0
        %1329 = vmatprep.subr.bf16.mxu0 0
        %1330 = vmatpush1.bf16.xpose.msra.mxu0 0
        %1331 = vmatprep.subr.bf16.mxu0 0
        %1332 = vmatpush1.bf16.xpose.msra.mxu0 0
        %1333 = vmatprep.subr.bf16.mxu0 0
        %1334 = vmatpush1.bf16.xpose.msra.mxu0 0
        %1335 = vmatprep.mubr.bf16.mxu0 0
        %1336 = vmatmul.mubr.bf16.gmra.mrb[0].mxu0 %v1298
        %v1337 = vpop.f32.mrb[0].mxu0
        %v1338 = vadd.f32 %v931, %v1337
        %v1339 = vpop.f32.mrb[0].mxu0
        %v1340 = vpop.f32.mrb[0].mxu0
        %v1341 = vadd.f32 %v931, %v1340
        %v1342 = vpop.f32.mrb[0].mxu0
        %1343 = vdwg.mxu0
        %v1344 = vsel %vm879, %v1338, -inf
        %1345 = vmax.xlane.f32.xlu0 %v1344
        %v1346 = vpop.xlane.xlu0 %1345
        %v1347 = vsel %vm879, %v1341, -inf
        %1348 = vmax.xlane.f32.xlu0 %v1347
        %v1349 = vpop.xlane.xlu0 %1348
        %v1350 = vsub.f32 %v1338, %v1346
        %v1351 = vsub.f32 %v1341, %v1349
        %v1352 = vmul.f32 %v1350, 1.442695
        %v1353 = vpow.pop %v1352
        %v1354 = vmul.f32 %v1351, 1.442695
        %v1355 = vpow.pop %v1354
        %v1356 = vsel %vm879, %v1353, 0.0
        %1357 = vadd.xlane.f32.xlu0 %v1356
        %v1358 = vpop.xlane.xlu0 %1357
        %v1359 = vsel %vm879, %v1355, 0.0
        %1360 = vadd.xlane.f32.xlu0 %v1359
        %v1361 = vpop.xlane.xlu0 %1360
        %v1362 = vpack.c.bf16 %v1355, %v1353
        %1363 = vrot.lane.b32.xlu0 %v926, 104
        %v1364 = vpop.permute.xlu0 %1363
        %v1367 = vsel %vm879, %v1362, 0
        %1369 = vmatprep.subr.bf16.mxu0 0
        %1370 = vmatpush1.bf16.msra.mxu0 %v1364
        %1371 = vmatprep.subr.bf16.mxu0 0
        %1372 = vmatpush1.bf16.msra.mxu0 0
        %1373 = vmatprep.subr.bf16.mxu0 0
        %1374 = vmatpush1.bf16.msra.mxu0 0
        %1375 = vmatprep.subr.bf16.mxu0 0
        %1376 = vmatpush1.bf16.msra.mxu0 0
        %1377 = vmatprep.subr.bf16.mxu0 0
        %1378 = vmatpush1.bf16.msra.mxu0 0
        %1379 = vmatprep.subr.bf16.mxu0 0
        %1380 = vmatpush1.bf16.msra.mxu0 0
        %1381 = vmatprep.subr.bf16.mxu0 0
        %1382 = vmatpush1.bf16.msra.mxu0 0
        %1383 = vmatprep.subr.bf16.mxu0 0
        %1384 = vmatpush1.bf16.msra.mxu0 0
        %1385 = vmatprep.subr.bf16.mxu0 0
        %1386 = vmatpush1.bf16.msra.mxu0 0
        %1387 = vmatprep.subr.bf16.mxu0 0
        %1388 = vmatpush1.bf16.msra.mxu0 0
        %1389 = vmatprep.subr.bf16.mxu0 0
        %1390 = vmatpush1.bf16.msra.mxu0 0
        %1391 = vmatprep.subr.bf16.mxu0 0
        %1392 = vmatpush1.bf16.msra.mxu0 0
        %1393 = vmatprep.subr.bf16.mxu0 0
        %1394 = vmatpush1.bf16.msra.mxu0 0
        %1395 = vmatprep.subr.bf16.mxu0 0
        %1396 = vmatpush1.bf16.msra.mxu0 0
        %1397 = vmatprep.subr.bf16.mxu0 0
        %1398 = vmatpush1.bf16.msra.mxu0 0
        %1399 = vmatprep.subr.bf16.mxu0 0
        %1400 = vmatpush1.bf16.msra.mxu0 0
        %1401 = vmatprep.mubr.bf16.mxu0 0
        %1402 = vmatmul.mubr.bf16.gmra.mrb[0].mxu0 %v1367
        %v1403 = vpop.f32.mrb[0].mxu0
        %v1404 = vadd.f32 0.0, %v1403
        %v1405 = vpop.f32.mrb[0].mxu0
        %v1406 = vpop.f32.mrb[0].mxu0
        %v1407 = vadd.f32 0.0, %v1406
        %v1408 = vpop.f32.mrb[0].mxu0
        %1409 = vdwg.mxu0
        %v1410 = vrcp.pop %v1358
        %v1411 = vrcp.pop %v1361
        %v1412 = vmul.f32 %v1404, %v1410
        %v1413 = vmul.f32 %v1407, %v1411
        %1416 = vrot.lane.b32.xlu0 %v1170, 8
        %v1417 = vpop.permute.xlu0 %1416
        %1418 = vrot.lane.b32.xlu0 %v1171, 8
        %v1419 = vpop.permute.xlu0 %1418
        %1424 = vrot.lane.b32.xlu0 %v1291, 16
        %v1425 = vpop.permute.xlu0 %1424
        %1426 = vrot.lane.b32.xlu0 %v1292, 16
        %v1427 = vpop.permute.xlu0 %1426
        %1432 = vrot.lane.b32.xlu0 %v1412, 24
        %v1433 = vpop.permute.xlu0 %1432
        %1434 = vrot.lane.b32.xlu0 %v1413, 24
        %v1435 = vpop.permute.xlu0 %1434
        %v1438 = vsel %vm933, %v1046, %v1417
        %v1439 = vsel %vm933, %v1047, %v1419
        %v1440 = vsel %vm879, %v1438, %v1425
        %v1441 = vsel %vm879, %v1439, %v1427
        %vm1442 = vcmask 195584
        %v1443 = vsel %vm1442, %v1440, %v1433
        %v1444 = vsel %vm1442, %v1441, %v1435
        %v1445 = vpack.c.bf16 %v1444, %v1443
        %v1446 = vld [vmem:[%s14] sm:$0xf]
        %v1447 = vld [vmem:[%s14 + $0x4] sm:$0xf]
        %v1448 = vld [vmem:[%s14 + $0x8] sm:$0xf]
        %v1449 = vld [vmem:[%s14 + $0xc] sm:$0xf]
        %v1450 = vld [vmem:[%s15] sm:$0x1]
        %v1452 = vlaneseq
        %v1453 = vshrl.u32 %v1452, 7
        %v1454 = vsub.s32 0, %v1453
        %v1455 = vrot.slane %v1450, %v1454
        %v1461 = vunpack.c.l.b16 %v1446
        %v1462 = vunpack.c.l.b16 %v1447
        %v1463 = vunpack.c.l.b16 %v1448
        %v1464 = vunpack.c.l.b16 %v1449
        %v1465 = vpack.c.b16 %v1462, %v1461
        %v1466 = vpack.c.b16 %v1464, %v1463
        %v1470 = vsel %vm750, %v1445, 0
        %1472 = vmatprep.subr.bf16.mxu0 0
        %1473 = vmatpush1.bf16.msra.mxu0 %v1465
        %1474 = vmatprep.subr.bf16.mxu0 0
        %1475 = vmatpush1.bf16.msra.mxu0 %v1466
        %1476 = vmatprep.subr.bf16.mxu0 0
        %1477 = vmatpush1.bf16.msra.mxu0 0
        %1478 = vmatprep.subr.bf16.mxu0 0
        %1479 = vmatpush1.bf16.msra.mxu0 0
        %1480 = vmatprep.subr.bf16.mxu0 0
        %1481 = vmatpush1.bf16.msra.mxu0 0
        %1482 = vmatprep.subr.bf16.mxu0 0
        %1483 = vmatpush1.bf16.msra.mxu0 0
        %1484 = vmatprep.subr.bf16.mxu0 0
        %1485 = vmatpush1.bf16.msra.mxu0 0
        %1486 = vmatprep.subr.bf16.mxu0 0
        %1487 = vmatpush1.bf16.msra.mxu0 0
        %1488 = vmatprep.subr.bf16.mxu0 0
        %1489 = vmatpush1.bf16.msra.mxu0 0
        %1490 = vmatprep.subr.bf16.mxu0 0
        %1491 = vmatpush1.bf16.msra.mxu0 0
        %1492 = vmatprep.subr.bf16.mxu0 0
        %1493 = vmatpush1.bf16.msra.mxu0 0
        %1494 = vmatprep.subr.bf16.mxu0 0
        %1495 = vmatpush1.bf16.msra.mxu0 0
        %1496 = vmatprep.subr.bf16.mxu0 0
        %1497 = vmatpush1.bf16.msra.mxu0 0
        %1498 = vmatprep.subr.bf16.mxu0 0
        %1499 = vmatpush1.bf16.msra.mxu0 0
        %1500 = vmatprep.subr.bf16.mxu0 0
        %1501 = vmatpush1.bf16.msra.mxu0 0
        %1502 = vmatprep.subr.bf16.mxu0 0
        %1503 = vmatpush1.bf16.msra.mxu0 0
        %1504 = vmatprep.mubr.bf16.mxu0 0
        %1505 = vmatmul.mubr.bf16.gmra.mrb[0].mxu0 %v1470
        %v1506 = vpop.f32.mrb[0].mxu0
        %v1507 = vadd.f32 %v1455, %v1506
        %v1508 = vpop.f32.mrb[0].mxu0
        %v1509 = vpop.f32.mrb[0].mxu0
        %v1510 = vadd.f32 %v1455, %v1509
        %v1511 = vpop.f32.mrb[0].mxu0
        %1512 = vdwg.mxu0
        %v1513 = vpack.c.bf16 %v1510, %v1507
        %v1514 = vld [vmem:[%s17] sm:$0xf]
        %v1515 = vld [vmem:[%s17 + $0x4] sm:$0xf]
        %v1516 = vld [vmem:[%s17 + $0x8] sm:$0xf]
        %v1517 = vld [vmem:[%s17 + $0xc] sm:$0xf]
        %v1518 = vld [vmem:[%s18] sm:$0x1]
        %v1520 = vlaneseq
        %v1521 = vshrl.u32 %v1520, 7
        %v1522 = vsub.s32 0, %v1521
        %v1523 = vrot.slane %v1518, %v1522
        %v1529 = vunpack.c.l.b16 %v1514
        %v1530 = vunpack.c.l.b16 %v1515
        %v1531 = vunpack.c.l.b16 %v1516
        %v1532 = vunpack.c.l.b16 %v1517
        %v1533 = vpack.c.b16 %v1530, %v1529
        %v1534 = vpack.c.b16 %v1532, %v1531
        %v1538 = vsel %vm750, %v1513, 0
        %1540 = vmatprep.subr.bf16.mxu0 0
        %1541 = vmatpush1.bf16.msra.mxu0 %v1533
        %1542 = vmatprep.subr.bf16.mxu0 0
        %1543 = vmatpush1.bf16.msra.mxu0 %v1534
        %1544 = vmatprep.subr.bf16.mxu0 0
        %1545 = vmatpush1.bf16.msra.mxu0 0
        %1546 = vmatprep.subr.bf16.mxu0 0
        %1547 = vmatpush1.bf16.msra.mxu0 0
        %1548 = vmatprep.subr.bf16.mxu0 0
        %1549 = vmatpush1.bf16.msra.mxu0 0
        %1550 = vmatprep.subr.bf16.mxu0 0
        %1551 = vmatpush1.bf16.msra.mxu0 0
        %1552 = vmatprep.subr.bf16.mxu0 0
        %1553 = vmatpush1.bf16.msra.mxu0 0
        %1554 = vmatprep.subr.bf16.mxu0 0
        %1555 = vmatpush1.bf16.msra.mxu0 0
        %1556 = vmatprep.subr.bf16.mxu0 0
        %1557 = vmatpush1.bf16.msra.mxu0 0
        %1558 = vmatprep.subr.bf16.mxu0 0
        %1559 = vmatpush1.bf16.msra.mxu0 0
        %1560 = vmatprep.subr.bf16.mxu0 0
        %1561 = vmatpush1.bf16.msra.mxu0 0
        %1562 = vmatprep.subr.bf16.mxu0 0
        %1563 = vmatpush1.bf16.msra.mxu0 0
        %1564 = vmatprep.subr.bf16.mxu0 0
        %1565 = vmatpush1.bf16.msra.mxu0 0
        %1566 = vmatprep.subr.bf16.mxu0 0
        %1567 = vmatpush1.bf16.msra.mxu0 0
        %1568 = vmatprep.subr.bf16.mxu0 0
        %1569 = vmatpush1.bf16.msra.mxu0 0
        %1570 = vmatprep.subr.bf16.mxu0 0
        %1571 = vmatpush1.bf16.msra.mxu0 0
        %1572 = vmatprep.mubr.bf16.mxu0 0
        %1573 = vmatmul.mubr.bf16.gmra.mrb[0].mxu0 %v1538
        %v1574 = vpop.f32.mrb[0].mxu0
        %v1575 = vadd.f32 %v1523, %v1574
        %v1576 = vpop.f32.mrb[0].mxu0
        %v1577 = vpop.f32.mrb[0].mxu0
        %v1578 = vadd.f32 %v1523, %v1577
        %v1579 = vpop.f32.mrb[0].mxu0
        %1580 = vdwg.mxu0
        %v1581 = vld [vmem:[%s16] sm:$0x1]
        %v1582 = vpack.c.bf16 %v1581, %v1581
        %v1583 = vpack.c.bf16 %v1578, %v1575
        %v1585 = vsel %vm933, %v1582, 0
        %v1588 = vsel %vm933, %v1583, 0
        %1590 = vmatprep.subr.bf16.mxu0 0
        %1591 = vmatpush1.bf16.xpose.msra.mxu0 %v1588
        %1592 = vmatprep.subr.bf16.mxu0 0
        %1593 = vmatpush1.bf16.xpose.msra.mxu0 0
        %1594 = vmatprep.subr.bf16.mxu0 0
        %1595 = vmatpush1.bf16.xpose.msra.mxu0 0
        %1596 = vmatprep.subr.bf16.mxu0 0
        %1597 = vmatpush1.bf16.xpose.msra.mxu0 0
        %1598 = vmatprep.subr.bf16.mxu0 0
        %1599 = vmatpush1.bf16.xpose.msra.mxu0 0
        %1600 = vmatprep.subr.bf16.mxu0 0
        %1601 = vmatpush1.bf16.xpose.msra.mxu0 0
        %1602 = vmatprep.subr.bf16.mxu0 0
        %1603 = vmatpush1.bf16.xpose.msra.mxu0 0
        %1604 = vmatprep.subr.bf16.mxu0 0
        %1605 = vmatpush1.bf16.xpose.msra.mxu0 0
        %1606 = vmatprep.subr.bf16.mxu0 0
        %1607 = vmatpush1.bf16.xpose.msra.mxu0 0
        %1608 = vmatprep.subr.bf16.mxu0 0
        %1609 = vmatpush1.bf16.xpose.msra.mxu0 0
        %1610 = vmatprep.subr.bf16.mxu0 0
        %1611 = vmatpush1.bf16.xpose.msra.mxu0 0
        %1612 = vmatprep.subr.bf16.mxu0 0
        %1613 = vmatpush1.bf16.xpose.msra.mxu0 0
        %1614 = vmatprep.subr.bf16.mxu0 0
        %1615 = vmatpush1.bf16.xpose.msra.mxu0 0
        %1616 = vmatprep.subr.bf16.mxu0 0
        %1617 = vmatpush1.bf16.xpose.msra.mxu0 0
        %1618 = vmatprep.subr.bf16.mxu0 0
        %1619 = vmatpush1.bf16.xpose.msra.mxu0 0
        %1620 = vmatprep.subr.bf16.mxu0 0
        %1621 = vmatpush1.bf16.xpose.msra.mxu0 0
        %1622 = vmatprep.mubr.bf16.mxu0 0
        %1623 = vmatmul.mubr.bf16.gmra.mrb[0].mxu0 %v1585
        %v1624 = vpop.f32.mrb[0].mxu0
        %v1625 = vadd.f32 %v725, %v1624
        %v1626 = vpop.f32.mrb[0].mxu0
        %v1627 = vpop.f32.mrb[0].mxu0
        %v1628 = vpop.f32.mrb[0].mxu0
        %1629 = vdwg.mxu0
        %vm1630 = vcmask 122880
        %v1631 = vsel %vm1630, %v1625, -inf
        %1632 = vmax.xlane.f32.xlu0 %v1631
        %v1633 = vpop.xlane.xlu0 %1632
        %v1634 = vsub.f32 %v1625, %v1633
        %v1635 = vmul.f32 %v1634, 1.442695
        %v1636 = vpow.pop %v1635
        %v1637 = vsel %vm1630, %v1636, 0.0
        %1638 = vadd.xlane.f32.xlu0 %v1637
        %v1639 = vpop.xlane.xlu0 %1638
        %v1640 = vpack.c.bf16 %v1636, %v1636
        %1642 = vrot.lane.b32.xlu0 %v1583, 96
        %v1643 = vpop.permute.xlu0 %1642
        %v1646 = vsel %vm879, %v1640, 0
        %1648 = vmatprep.subr.bf16.mxu0 0
        %1649 = vmatpush1.bf16.msra.mxu0 %v1643
        %1650 = vmatprep.subr.bf16.mxu0 0
        %1651 = vmatpush1.bf16.msra.mxu0 0
        %1652 = vmatprep.subr.bf16.mxu0 0
        %1653 = vmatpush1.bf16.msra.mxu0 0
        %1654 = vmatprep.subr.bf16.mxu0 0
        %1655 = vmatpush1.bf16.msra.mxu0 0
        %1656 = vmatprep.subr.bf16.mxu0 0
        %1657 = vmatpush1.bf16.msra.mxu0 0
        %1658 = vmatprep.subr.bf16.mxu0 0
        %1659 = vmatpush1.bf16.msra.mxu0 0
        %1660 = vmatprep.subr.bf16.mxu0 0
        %1661 = vmatpush1.bf16.msra.mxu0 0
        %1662 = vmatprep.subr.bf16.mxu0 0
        %1663 = vmatpush1.bf16.msra.mxu0 0
        %1664 = vmatprep.subr.bf16.mxu0 0
        %1665 = vmatpush1.bf16.msra.mxu0 0
        %1666 = vmatprep.subr.bf16.mxu0 0
        %1667 = vmatpush1.bf16.msra.mxu0 0
        %1668 = vmatprep.subr.bf16.mxu0 0
        %1669 = vmatpush1.bf16.msra.mxu0 0
        %1670 = vmatprep.subr.bf16.mxu0 0
        %1671 = vmatpush1.bf16.msra.mxu0 0
        %1672 = vmatprep.subr.bf16.mxu0 0
        %1673 = vmatpush1.bf16.msra.mxu0 0
        %1674 = vmatprep.subr.bf16.mxu0 0
        %1675 = vmatpush1.bf16.msra.mxu0 0
        %1676 = vmatprep.subr.bf16.mxu0 0
        %1677 = vmatpush1.bf16.msra.mxu0 0
        %1678 = vmatprep.subr.bf16.mxu0 0
        %1679 = vmatpush1.bf16.msra.mxu0 0
        %1680 = vmatprep.mubr.bf16.mxu0 0
        %1681 = vmatmul.mubr.bf16.gmra.mrb[0].mxu0 %v1646
        %v1682 = vpop.f32.mrb[0].mxu0
        %v1683 = vadd.f32 0.0, %v1682
        %v1684 = vpop.f32.mrb[0].mxu0
        %v1685 = vpop.f32.mrb[0].mxu0
        %v1686 = vpop.f32.mrb[0].mxu0
        %1687 = vdwg.mxu0
        %v1688 = vrcp.pop %v1639
        %v1689 = vmul.f32 %v1683, %v1688
        %1691 = vrot.lane.b32.xlu0 %v1582, 120
        %v1692 = vpop.permute.xlu0 %1691
        %1693 = vrot.lane.b32.xlu0 %v1583, 120
        %v1694 = vpop.permute.xlu0 %1693
        %v1696 = vsel %vm933, %v1692, 0
        %v1699 = vsel %vm933, %v1694, 0
        %1701 = vmatprep.subr.bf16.mxu0 0
        %1702 = vmatpush1.bf16.xpose.msra.mxu0 %v1699
        %1703 = vmatprep.subr.bf16.mxu0 0
        %1704 = vmatpush1.bf16.xpose.msra.mxu0 0
        %1705 = vmatprep.subr.bf16.mxu0 0
        %1706 = vmatpush1.bf16.xpose.msra.mxu0 0
        %1707 = vmatprep.subr.bf16.mxu0 0
        %1708 = vmatpush1.bf16.xpose.msra.mxu0 0
        %1709 = vmatprep.subr.bf16.mxu0 0
        %1710 = vmatpush1.bf16.xpose.msra.mxu0 0
        %1711 = vmatprep.subr.bf16.mxu0 0
        %1712 = vmatpush1.bf16.xpose.msra.mxu0 0
        %1713 = vmatprep.subr.bf16.mxu0 0
        %1714 = vmatpush1.bf16.xpose.msra.mxu0 0
        %1715 = vmatprep.subr.bf16.mxu0 0
        %1716 = vmatpush1.bf16.xpose.msra.mxu0 0
        %1717 = vmatprep.subr.bf16.mxu0 0
        %1718 = vmatpush1.bf16.xpose.msra.mxu0 0
        %1719 = vmatprep.subr.bf16.mxu0 0
        %1720 = vmatpush1.bf16.xpose.msra.mxu0 0
        %1721 = vmatprep.subr.bf16.mxu0 0
        %1722 = vmatpush1.bf16.xpose.msra.mxu0 0
        %1723 = vmatprep.subr.bf16.mxu0 0
        %1724 = vmatpush1.bf16.xpose.msra.mxu0 0
        %1725 = vmatprep.subr.bf16.mxu0 0
        %1726 = vmatpush1.bf16.xpose.msra.mxu0 0
        %1727 = vmatprep.subr.bf16.mxu0 0
        %1728 = vmatpush1.bf16.xpose.msra.mxu0 0
        %1729 = vmatprep.subr.bf16.mxu0 0
        %1730 = vmatpush1.bf16.xpose.msra.mxu0 0
        %1731 = vmatprep.subr.bf16.mxu0 0
        %1732 = vmatpush1.bf16.xpose.msra.mxu0 0
        %1733 = vmatprep.mubr.bf16.mxu0 0
        %1734 = vmatmul.mubr.bf16.gmra.mrb[0].mxu0 %v1696
        %v1735 = vpop.f32.mrb[0].mxu0
        %v1736 = vadd.f32 %v725, %v1735
        %v1737 = vpop.f32.mrb[0].mxu0
        %v1738 = vpop.f32.mrb[0].mxu0
        %v1739 = vpop.f32.mrb[0].mxu0
        %1740 = vdwg.mxu0
        %v1741 = vsel %vm1630, %v1736, -inf
        %1742 = vmax.xlane.f32.xlu0 %v1741
        %v1743 = vpop.xlane.xlu0 %1742
        %v1744 = vsub.f32 %v1736, %v1743
        %v1745 = vmul.f32 %v1744, 1.442695
        %v1746 = vpow.pop %v1745
        %v1747 = vsel %vm1630, %v1746, 0.0
        %1748 = vadd.xlane.f32.xlu0 %v1747
        %v1749 = vpop.xlane.xlu0 %1748
        %v1750 = vpack.c.bf16 %v1746, %v1746
        %1751 = vrot.lane.b32.xlu0 %v1583, 88
        %v1752 = vpop.permute.xlu0 %1751
        %v1755 = vsel %vm879, %v1750, 0
        %1757 = vmatprep.subr.bf16.mxu0 0
        %1758 = vmatpush1.bf16.msra.mxu0 %v1752
        %1759 = vmatprep.subr.bf16.mxu0 0
        %1760 = vmatpush1.bf16.msra.mxu0 0
        %1761 = vmatprep.subr.bf16.mxu0 0
        %1762 = vmatpush1.bf16.msra.mxu0 0
        %1763 = vmatprep.subr.bf16.mxu0 0
        %1764 = vmatpush1.bf16.msra.mxu0 0
        %1765 = vmatprep.subr.bf16.mxu0 0
        %1766 = vmatpush1.bf16.msra.mxu0 0
        %1767 = vmatprep.subr.bf16.mxu0 0
        %1768 = vmatpush1.bf16.msra.mxu0 0
        %1769 = vmatprep.subr.bf16.mxu0 0
        %1770 = vmatpush1.bf16.msra.mxu0 0
        %1771 = vmatprep.subr.bf16.mxu0 0
        %1772 = vmatpush1.bf16.msra.mxu0 0
        %1773 = vmatprep.subr.bf16.mxu0 0
        %1774 = vmatpush1.bf16.msra.mxu0 0
        %1775 = vmatprep.subr.bf16.mxu0 0
        %1776 = vmatpush1.bf16.msra.mxu0 0
        %1777 = vmatprep.subr.bf16.mxu0 0
        %1778 = vmatpush1.bf16.msra.mxu0 0
        %1779 = vmatprep.subr.bf16.mxu0 0
        %1780 = vmatpush1.bf16.msra.mxu0 0
        %1781 = vmatprep.subr.bf16.mxu0 0
        %1782 = vmatpush1.bf16.msra.mxu0 0
        %1783 = vmatprep.subr.bf16.mxu0 0
        %1784 = vmatpush1.bf16.msra.mxu0 0
        %1785 = vmatprep.subr.bf16.mxu0 0
        %1786 = vmatpush1.bf16.msra.mxu0 0
        %1787 = vmatprep.subr.bf16.mxu0 0
        %1788 = vmatpush1.bf16.msra.mxu0 0
        %1789 = vmatprep.mubr.bf16.mxu0 0
        %1790 = vmatmul.mubr.bf16.gmra.mrb[0].mxu0 %v1755
        %v1791 = vpop.f32.mrb[0].mxu0
        %v1792 = vadd.f32 0.0, %v1791
        %v1793 = vpop.f32.mrb[0].mxu0
        %v1794 = vpop.f32.mrb[0].mxu0
        %v1795 = vpop.f32.mrb[0].mxu0
        %1796 = vdwg.mxu0
        %v1797 = vrcp.pop %v1749
        %v1798 = vmul.f32 %v1792, %v1797
        %1799 = vrot.lane.b32.xlu0 %v1582, 112
        %v1800 = vpop.permute.xlu0 %1799
        %1801 = vrot.lane.b32.xlu0 %v1583, 112
        %v1802 = vpop.permute.xlu0 %1801
        %v1804 = vsel %vm933, %v1800, 0
        %v1807 = vsel %vm933, %v1802, 0
        %1809 = vmatprep.subr.bf16.mxu0 0
        %1810 = vmatpush1.bf16.xpose.msra.mxu0 %v1807
        %1811 = vmatprep.subr.bf16.mxu0 0
        %1812 = vmatpush1.bf16.xpose.msra.mxu0 0
        %1813 = vmatprep.subr.bf16.mxu0 0
        %1814 = vmatpush1.bf16.xpose.msra.mxu0 0
        %1815 = vmatprep.subr.bf16.mxu0 0
        %1816 = vmatpush1.bf16.xpose.msra.mxu0 0
        %1817 = vmatprep.subr.bf16.mxu0 0
        %1818 = vmatpush1.bf16.xpose.msra.mxu0 0
        %1819 = vmatprep.subr.bf16.mxu0 0
        %1820 = vmatpush1.bf16.xpose.msra.mxu0 0
        %1821 = vmatprep.subr.bf16.mxu0 0
        %1822 = vmatpush1.bf16.xpose.msra.mxu0 0
        %1823 = vmatprep.subr.bf16.mxu0 0
        %1824 = vmatpush1.bf16.xpose.msra.mxu0 0
        %1825 = vmatprep.subr.bf16.mxu0 0
        %1826 = vmatpush1.bf16.xpose.msra.mxu0 0
        %1827 = vmatprep.subr.bf16.mxu0 0
        %1828 = vmatpush1.bf16.xpose.msra.mxu0 0
        %1829 = vmatprep.subr.bf16.mxu0 0
        %1830 = vmatpush1.bf16.xpose.msra.mxu0 0
        %1831 = vmatprep.subr.bf16.mxu0 0
        %1832 = vmatpush1.bf16.xpose.msra.mxu0 0
        %1833 = vmatprep.subr.bf16.mxu0 0
        %1834 = vmatpush1.bf16.xpose.msra.mxu0 0
        %1835 = vmatprep.subr.bf16.mxu0 0
        %1836 = vmatpush1.bf16.xpose.msra.mxu0 0
        %1837 = vmatprep.subr.bf16.mxu0 0
        %1838 = vmatpush1.bf16.xpose.msra.mxu0 0
        %1839 = vmatprep.subr.bf16.mxu0 0
        %1840 = vmatpush1.bf16.xpose.msra.mxu0 0
        %1841 = vmatprep.mubr.bf16.mxu0 0
        %1842 = vmatmul.mubr.bf16.gmra.mrb[0].mxu0 %v1804
        %v1843 = vpop.f32.mrb[0].mxu0
        %v1844 = vadd.f32 %v725, %v1843
        %v1845 = vpop.f32.mrb[0].mxu0
        %v1846 = vpop.f32.mrb[0].mxu0
        %v1847 = vpop.f32.mrb[0].mxu0
        %1848 = vdwg.mxu0
        %v1849 = vsel %vm1630, %v1844, -inf
        %1850 = vmax.xlane.f32.xlu0 %v1849
        %v1851 = vpop.xlane.xlu0 %1850
        %v1852 = vsub.f32 %v1844, %v1851
        %v1853 = vmul.f32 %v1852, 1.442695
        %v1854 = vpow.pop %v1853
        %v1855 = vsel %vm1630, %v1854, 0.0
        %1856 = vadd.xlane.f32.xlu0 %v1855
        %v1857 = vpop.xlane.xlu0 %1856
        %v1858 = vpack.c.bf16 %v1854, %v1854
        %1859 = vrot.lane.b32.xlu0 %v1583, 80
        %v1860 = vpop.permute.xlu0 %1859
        %v1863 = vsel %vm879, %v1858, 0
        %1865 = vmatprep.subr.bf16.mxu0 0
        %1866 = vmatpush1.bf16.msra.mxu0 %v1860
        %1867 = vmatprep.subr.bf16.mxu0 0
        %1868 = vmatpush1.bf16.msra.mxu0 0
        %1869 = vmatprep.subr.bf16.mxu0 0
        %1870 = vmatpush1.bf16.msra.mxu0 0
        %1871 = vmatprep.subr.bf16.mxu0 0
        %1872 = vmatpush1.bf16.msra.mxu0 0
        %1873 = vmatprep.subr.bf16.mxu0 0
        %1874 = vmatpush1.bf16.msra.mxu0 0
        %1875 = vmatprep.subr.bf16.mxu0 0
        %1876 = vmatpush1.bf16.msra.mxu0 0
        %1877 = vmatprep.subr.bf16.mxu0 0
        %1878 = vmatpush1.bf16.msra.mxu0 0
        %1879 = vmatprep.subr.bf16.mxu0 0
        %1880 = vmatpush1.bf16.msra.mxu0 0
        %1881 = vmatprep.subr.bf16.mxu0 0
        %1882 = vmatpush1.bf16.msra.mxu0 0
        %1883 = vmatprep.subr.bf16.mxu0 0
        %1884 = vmatpush1.bf16.msra.mxu0 0
        %1885 = vmatprep.subr.bf16.mxu0 0
        %1886 = vmatpush1.bf16.msra.mxu0 0
        %1887 = vmatprep.subr.bf16.mxu0 0
        %1888 = vmatpush1.bf16.msra.mxu0 0
        %1889 = vmatprep.subr.bf16.mxu0 0
        %1890 = vmatpush1.bf16.msra.mxu0 0
        %1891 = vmatprep.subr.bf16.mxu0 0
        %1892 = vmatpush1.bf16.msra.mxu0 0
        %1893 = vmatprep.subr.bf16.mxu0 0
        %1894 = vmatpush1.bf16.msra.mxu0 0
        %1895 = vmatprep.subr.bf16.mxu0 0
        %1896 = vmatpush1.bf16.msra.mxu0 0
        %1897 = vmatprep.mubr.bf16.mxu0 0
        %1898 = vmatmul.mubr.bf16.gmra.mrb[0].mxu0 %v1863
        %v1899 = vpop.f32.mrb[0].mxu0
        %v1900 = vadd.f32 0.0, %v1899
        %v1901 = vpop.f32.mrb[0].mxu0
        %v1902 = vpop.f32.mrb[0].mxu0
        %v1903 = vpop.f32.mrb[0].mxu0
        %1904 = vdwg.mxu0
        %v1905 = vrcp.pop %v1857
        %v1906 = vmul.f32 %v1900, %v1905
        %1907 = vrot.lane.b32.xlu0 %v1582, 104
        %v1908 = vpop.permute.xlu0 %1907
        %1909 = vrot.lane.b32.xlu0 %v1583, 104
        %v1910 = vpop.permute.xlu0 %1909
        %v1912 = vsel %vm933, %v1908, 0
        %v1915 = vsel %vm933, %v1910, 0
        %1917 = vmatprep.subr.bf16.mxu0 0
        %1918 = vmatpush1.bf16.xpose.msra.mxu0 %v1915
        %1919 = vmatprep.subr.bf16.mxu0 0
        %1920 = vmatpush1.bf16.xpose.msra.mxu0 0
        %1921 = vmatprep.subr.bf16.mxu0 0
        %1922 = vmatpush1.bf16.xpose.msra.mxu0 0
        %1923 = vmatprep.subr.bf16.mxu0 0
        %1924 = vmatpush1.bf16.xpose.msra.mxu0 0
        %1925 = vmatprep.subr.bf16.mxu0 0
        %1926 = vmatpush1.bf16.xpose.msra.mxu0 0
        %1927 = vmatprep.subr.bf16.mxu0 0
        %1928 = vmatpush1.bf16.xpose.msra.mxu0 0
        %1929 = vmatprep.subr.bf16.mxu0 0
        %1930 = vmatpush1.bf16.xpose.msra.mxu0 0
        %1931 = vmatprep.subr.bf16.mxu0 0
        %1932 = vmatpush1.bf16.xpose.msra.mxu0 0
        %1933 = vmatprep.subr.bf16.mxu0 0
        %1934 = vmatpush1.bf16.xpose.msra.mxu0 0
        %1935 = vmatprep.subr.bf16.mxu0 0
        %1936 = vmatpush1.bf16.xpose.msra.mxu0 0
        %1937 = vmatprep.subr.bf16.mxu0 0
        %1938 = vmatpush1.bf16.xpose.msra.mxu0 0
        %1939 = vmatprep.subr.bf16.mxu0 0
        %1940 = vmatpush1.bf16.xpose.msra.mxu0 0
        %1941 = vmatprep.subr.bf16.mxu0 0
        %1942 = vmatpush1.bf16.xpose.msra.mxu0 0
        %1943 = vmatprep.subr.bf16.mxu0 0
        %1944 = vmatpush1.bf16.xpose.msra.mxu0 0
        %1945 = vmatprep.subr.bf16.mxu0 0
        %1946 = vmatpush1.bf16.xpose.msra.mxu0 0
        %1947 = vmatprep.subr.bf16.mxu0 0
        %1948 = vmatpush1.bf16.xpose.msra.mxu0 0
        %1949 = vmatprep.mubr.bf16.mxu0 0
        %1950 = vmatmul.mubr.bf16.gmra.mrb[0].mxu0 %v1912
        %v1951 = vpop.f32.mrb[0].mxu0
        %v1952 = vadd.f32 %v725, %v1951
        %v1953 = vpop.f32.mrb[0].mxu0
        %v1954 = vpop.f32.mrb[0].mxu0
        %v1955 = vpop.f32.mrb[0].mxu0
        %1956 = vdwg.mxu0
        %v1957 = vsel %vm1630, %v1952, -inf
        %1958 = vmax.xlane.f32.xlu0 %v1957
        %v1959 = vpop.xlane.xlu0 %1958
        %v1960 = vsub.f32 %v1952, %v1959
        %v1961 = vmul.f32 %v1960, 1.442695
        %v1962 = vpow.pop %v1961
        %v1963 = vsel %vm1630, %v1962, 0.0
        %1964 = vadd.xlane.f32.xlu0 %v1963
        %v1965 = vpop.xlane.xlu0 %1964
        %v1966 = vpack.c.bf16 %v1962, %v1962
        %1967 = vrot.lane.b32.xlu0 %v1583, 72
        %v1968 = vpop.permute.xlu0 %1967
        %v1971 = vsel %vm879, %v1966, 0
        %1973 = vmatprep.subr.bf16.mxu0 0
        %1974 = vmatpush1.bf16.msra.mxu0 %v1968
        %1975 = vmatprep.subr.bf16.mxu0 0
        %1976 = vmatpush1.bf16.msra.mxu0 0
        %1977 = vmatprep.subr.bf16.mxu0 0
        %1978 = vmatpush1.bf16.msra.mxu0 0
        %1979 = vmatprep.subr.bf16.mxu0 0
        %1980 = vmatpush1.bf16.msra.mxu0 0
        %1981 = vmatprep.subr.bf16.mxu0 0
        %1982 = vmatpush1.bf16.msra.mxu0 0
        %1983 = vmatprep.subr.bf16.mxu0 0
        %1984 = vmatpush1.bf16.msra.mxu0 0
        %1985 = vmatprep.subr.bf16.mxu0 0
        %1986 = vmatpush1.bf16.msra.mxu0 0
        %1987 = vmatprep.subr.bf16.mxu0 0
        %1988 = vmatpush1.bf16.msra.mxu0 0
        %1989 = vmatprep.subr.bf16.mxu0 0
        %1990 = vmatpush1.bf16.msra.mxu0 0
        %1991 = vmatprep.subr.bf16.mxu0 0
        %1992 = vmatpush1.bf16.msra.mxu0 0
        %1993 = vmatprep.subr.bf16.mxu0 0
        %1994 = vmatpush1.bf16.msra.mxu0 0
        %1995 = vmatprep.subr.bf16.mxu0 0
        %1996 = vmatpush1.bf16.msra.mxu0 0
        %1997 = vmatprep.subr.bf16.mxu0 0
        %1998 = vmatpush1.bf16.msra.mxu0 0
        %1999 = vmatprep.subr.bf16.mxu0 0
        %2000 = vmatpush1.bf16.msra.mxu0 0
        %2001 = vmatprep.subr.bf16.mxu0 0
        %2002 = vmatpush1.bf16.msra.mxu0 0
        %2003 = vmatprep.subr.bf16.mxu0 0
        %2004 = vmatpush1.bf16.msra.mxu0 0
        %2005 = vmatprep.mubr.bf16.mxu0 0
        %2006 = vmatmul.mubr.bf16.gmra.mrb[0].mxu0 %v1971
        %v2007 = vpop.f32.mrb[0].mxu0
        %v2008 = vadd.f32 0.0, %v2007
        %v2009 = vpop.f32.mrb[0].mxu0
        %v2010 = vpop.f32.mrb[0].mxu0
        %v2011 = vpop.f32.mrb[0].mxu0
        %2012 = vdwg.mxu0
        %v2013 = vrcp.pop %v1965
        %v2014 = vmul.f32 %v2008, %v2013
        %2016 = vrot.lane.b32.xlu0 %v1798, 8
        %v2017 = vpop.permute.xlu0 %2016
        %2020 = vrot.lane.b32.xlu0 %v1906, 16
        %v2021 = vpop.permute.xlu0 %2020
        %2024 = vrot.lane.b32.xlu0 %v2014, 24
        %v2025 = vpop.permute.xlu0 %2024
        %v2027 = vsel %vm933, %v1689, %v2017
        %v2028 = vsel %vm879, %v2027, %v2021
        %v2029 = vsel %vm1442, %v2028, %v2025
        %v2030 = vpack.c.bf16 %v2029, %v2029
        %v2031 = vld [vmem:[%s19] sm:$0xf]
        %v2032 = vld [vmem:[%s19 + $0x4] sm:$0xf]
        %v2033 = vld [vmem:[%s19 + $0x8] sm:$0xf]
        %v2034 = vld [vmem:[%s19 + $0xc] sm:$0xf]
        %v2035 = vld [vmem:[%s20] sm:$0x1]
        %v2040 = vunpack.c.l.b16 %v2031
        %v2041 = vunpack.c.l.b16 %v2032
        %v2042 = vunpack.c.l.b16 %v2033
        %v2043 = vunpack.c.l.b16 %v2034
        %v2044 = vpack.c.b16 %v2041, %v2040
        %v2045 = vpack.c.b16 %v2043, %v2042
        %v2049 = vsel %vm750, %v2030, 0
        %2051 = vmatprep.subr.bf16.mxu0 0
        %2052 = vmatpush1.bf16.msra.mxu0 %v2044
        %2053 = vmatprep.subr.bf16.mxu0 0
        %2054 = vmatpush1.bf16.msra.mxu0 %v2045
        %2055 = vmatprep.subr.bf16.mxu0 0
        %2056 = vmatpush1.bf16.msra.mxu0 0
        %2057 = vmatprep.subr.bf16.mxu0 0
        %2058 = vmatpush1.bf16.msra.mxu0 0
        %2059 = vmatprep.subr.bf16.mxu0 0
        %2060 = vmatpush1.bf16.msra.mxu0 0
        %2061 = vmatprep.subr.bf16.mxu0 0
        %2062 = vmatpush1.bf16.msra.mxu0 0
        %2063 = vmatprep.subr.bf16.mxu0 0
        %2064 = vmatpush1.bf16.msra.mxu0 0
        %2065 = vmatprep.subr.bf16.mxu0 0
        %2066 = vmatpush1.bf16.msra.mxu0 0
        %2067 = vmatprep.subr.bf16.mxu0 0
        %2068 = vmatpush1.bf16.msra.mxu0 0
        %2069 = vmatprep.subr.bf16.mxu0 0
        %2070 = vmatpush1.bf16.msra.mxu0 0
        %2071 = vmatprep.subr.bf16.mxu0 0
        %2072 = vmatpush1.bf16.msra.mxu0 0
        %2073 = vmatprep.subr.bf16.mxu0 0
        %2074 = vmatpush1.bf16.msra.mxu0 0
        %2075 = vmatprep.subr.bf16.mxu0 0
        %2076 = vmatpush1.bf16.msra.mxu0 0
        %2077 = vmatprep.subr.bf16.mxu0 0
        %2078 = vmatpush1.bf16.msra.mxu0 0
        %2079 = vmatprep.subr.bf16.mxu0 0
        %2080 = vmatpush1.bf16.msra.mxu0 0
        %2081 = vmatprep.subr.bf16.mxu0 0
        %2082 = vmatpush1.bf16.msra.mxu0 0
        %2083 = vmatprep.mubr.bf16.mxu0 0
        %2084 = vmatmul.mubr.bf16.gmra.mrb[0].mxu0 %v2049
        %v2085 = vpop.f32.mrb[0].mxu0
        %v2086 = vadd.f32 %v2035, %v2085
        %v2087 = vpop.f32.mrb[0].mxu0
        %v2088 = vpop.f32.mrb[0].mxu0
        %v2089 = vpop.f32.mrb[0].mxu0
        %2090 = vdwg.mxu0
        %vm2091 = vcmask 253952
        %2092 = vst.msk [vmem:[%s694] sm:$0x1] %vm2091, %v2086
        %s2093 = sand.u32 %s509, 1
        %s2094 = scalar_lea.sflag [#allocation3], %s2093
        %s2095 = sand.u32 %s509, 1
        %s2096 = scalar_lea.vmem [#allocation2], %s2095
        // Predicated region
        $region105: #{attention_with_learnable_embedding.1} parent=103 // pred_check
          %p2097 = pneg %p519
        $region106: #{attention_with_learnable_embedding.1} parent=103 // pred_check_branch
          %2099 = sbr.rel (%p2097) target = $region108
        $region107: #{attention_with_learnable_embedding.1} parent=103 // pred_region
          %s2101 = ssub.s32 16, 16
          %2102 = vsyncadd %s2094, %s2101
          %s2103 = smul.addr %s35, 16
          %s2104 = scalar_lea.hbm %s21, %s2103
          %s2106 = sshll.u32 %s2096, 4
          %s2107 = int_to_ptr.vmem [resolvable:$true] %s2106
          %2109 = dma.vmem_to_hbm [thread:$0]  %s2107, 16, %s2104, %s2094
        $region108: #{attention_with_learnable_embedding.1} parent=103 // pred_fallthru
          _
      $region104: #{attention_with_learnable_embedding.1} parent=5 // pred_fallthru
        _
      %p2110 = scmp.le.s32.totalorder 2, %s30
      // Predicated region
      $region109: #{attention_with_learnable_embedding.1} parent=5 // pred_check
        %p2111 = pneg %p2110
      $region110: #{attention_with_learnable_embedding.1} parent=5 // pred_check_branch
        %2113 = sbr.rel (%p2111) target = $region112
      $region111: #{attention_with_learnable_embedding.1} parent=5 // pred_region
        %s2114 = ssub.s32 %s30, 2
        // Predicated region
        $region113: #{attention_with_learnable_embedding.1} parent=111 // pred_check
          %p2115 = pneg %p525
        $region114: #{attention_with_learnable_embedding.1} parent=111 // pred_check_branch
          %2117 = sbr.rel (%p2115) target = $region116
        $region115: #{attention_with_learnable_embedding.1} parent=111 // pred_region
          %s2118 = sand.u32 %s510, 1
          %s2119 = scalar_lea.sflag [#allocation3], %s2118
          %s2120 = sand.u32 %s510, 1
          %s2121 = scalar_lea.vmem [#allocation2], %s2120
          %2122 = dma.done %s2119, 16
        $region116: #{attention_with_learnable_embedding.1} parent=111 // pred_fallthru
          _
      $region112: #{attention_with_learnable_embedding.1} parent=5 // pred_fallthru
        _
    $region6: #{attention_with_learnable_embedding.1} parent=1 // loop_footer
      %s34 = sadd.s32 1, %s30
    $region7: #{attention_with_learnable_embedding.1} parent=1 // loop_footer_branch
      %29 = sbr.rel target = $region3
    $region8: #{attention_with_learnable_embedding.1} parent=1 // loop_exit
      _
    %2123 = vsyncpa [#allocation3], 1
    %s2124 = scalar_lea.sflag [#allocation3], 1
    %2125 = vsyncpa %s2124, 1

</llo_original>
